<compile_context>
chip_gen: v6e
topology: v6e:2x2x1
jax: 0.10.0
libtpu: 0.0.40
codegen_flags: <defaults>
</compile_context>

<pallas_src>
import jax
import jax.numpy as jnp
from jax.experimental import pallas as pl
from jax.experimental.pallas import tpu as pltpu


# ------------------------------------------------------------------ kernel ---

def _make_upblock_kernel(H, Wg):
    """Kernel closure over static spatial sizes.

    Layout: activations are (C, L) with L flattened row-major over a grid
    whose row stride is Wg = W + 4 (2 zero columns each side).  The h1/h2
    VMEM buffers additionally carry 2 zero rows above and below the valid
    H rows, so every 3x3 / deconv tap is a static flat shift d = dr*Wg + dc.
    """
    Lv = H * Wg                    # valid-rows slab (what we compute/store)
    base = 2 * Wg                  # offset of the valid rows inside h1/h2
    offs = [dr * Wg + dc for dr in (-1, 0, 1) for dc in (-1, 0, 1)]

    def kernel(x_ref, mask_ref, w1_ref, b1_ref, w3_ref, b3_ref,
               wd_ref, bd_ref, o_ref, h1_ref, h2_ref):
        Cin = h1_ref.shape[0]
        Cout = h2_ref.shape[0]
        mask = mask_ref[...]                                   # (1, Lv) f32

        # Zero only the flank rows (2 top + 2 bottom); the interior is fully
        # overwritten below.  Unconditional -> megacore-safe.
        zt1 = jnp.zeros((Cin, base), h1_ref.dtype)
        h1_ref[:, 0:base] = zt1
        h1_ref[:, base + Lv:2 * base + Lv] = zt1
        zt2 = jnp.zeros((Cout, base), h2_ref.dtype)
        h2_ref[:, 0:base] = zt2
        h2_ref[:, base + Lv:2 * base + Lv] = zt2

        # ---- stage 1: 1x1 conv + ReLU ------------------------------------
        h1 = jnp.dot(w1_ref[...], x_ref[0],
                     preferred_element_type=jnp.float32)       # (Cin, Lv)
        h1 = jnp.maximum(h1 + b1_ref[...], 0.0) * mask         # mask is load-bearing
        h1_ref[:, base:base + Lv] = h1.astype(h1_ref.dtype)

        # ---- stage 2: 3x3 conv + ReLU (9 accumulating taps, no im2col) ---
        acc = None
        for t, d in enumerate(offs):
            tap = jnp.dot(w3_ref[t], h1_ref[:, base + d:base + d + Lv],
                          preferred_element_type=jnp.float32)  # (Cout, Lv)
            acc = tap if acc is None else acc + tap
        h2 = jnp.maximum(acc + b3_ref[...], 0.0) * mask
        h2_ref[:, base:base + Lv] = h2.astype(h2_ref.dtype)

        # ---- stage 3: ConvTranspose2d(k=4, s=2, p=1), all 4 parities -----
        acc = None
        for t, d in enumerate(offs):
            tap = jnp.dot(wd_ref[t], h2_ref[:, base + d:base + d + Lv],
                          preferred_element_type=jnp.float32)  # (4*Cout, Lv)
            acc = tap if acc is None else acc + tap
        # Row (2a+b)*Cout + co at flat column r*Wg + cg holds
        # out[co, 2r+a, 2(cg-2)+b]; the wrapper crops/interleaves.
        o_ref[0] = acc + bd_ref[...]

    return kernel


# ----------------------------------------------------------------- wrapper ---

# ConvTranspose2d(k=4, s=2, p=1) tap tables: output parity -> {offset: k-index}.
_ROW_TAP = ({-1: 3, 0: 1},     # parity 0: out[2r]   = h[r-1]*W[3] + h[r]*W[1]
            {0: 2, 1: 0})      # parity 1: out[2r+1] = h[r]  *W[2] + h[r+1]*W[0]


@jax.jit
def up_block_forward(x_nchw, w1_pt, b1, w3_pt, b3, wd_pt, bd):
    """UpBlock forward. PyTorch-layout params, NCHW in, NCHW out."""
    N, Cin, H, W = x_nchw.shape
    Cout = w3_pt.shape[0]
    Wg = W + 4
    Lv = H * Wg
    Lbuf = (H + 4) * Wg

    # Input: zero-pad columns by 2 (the 2 zero flank *rows* live only in the
    # kernel's persistent VMEM buffers), flatten, cast matmul operand to bf16.
    xg = jnp.pad(x_nchw, ((0, 0), (0, 0), (0, 0), (2, 2)))
    xg = xg.reshape(N, Cin, Lv).astype(jnp.bfloat16)

    # Valid-column mask on the flattened (H, Wg) grid (f32 elementwise math).
    mask = (jnp.zeros((H, Wg), jnp.float32).at[:, 2:W + 2].set(1.0)
            .reshape(1, Lv))

    # ---- weight repacking (tiny; stack/concatenate, no .at[].set chains) --
    w1 = w1_pt[:, :, 0, 0].astype(jnp.bfloat16)                  # (Cin, Cin)
    b1c = b1.reshape(Cin, 1).astype(jnp.float32)
    # 3x3 conv taps, t = (dr+1)*3 + (dc+1)  ->  (9, Cout, Cin)
    w3t = jnp.stack([w3_pt[:, :, dr + 1, dc + 1]
                     for dr in (-1, 0, 1) for dc in (-1, 0, 1)]
                    ).astype(jnp.bfloat16)
    b3c = b3.reshape(Cout, 1).astype(jnp.float32)
    # Deconv: all 4 output parities per tap  ->  (9, 4*Cout, Cout).
    zero_blk = jnp.zeros((Cout, Cout), jnp.float32)
    wdt = jnp.stack([
        jnp.concatenate([
            (wd_pt[:, :, _ROW_TAP[a][dr], _ROW_TAP[b_][dc]].T
             if (dr in _ROW_TAP[a] and dc in _ROW_TAP[b_]) else zero_blk)
            for a in (0, 1) for b_ in (0, 1)], axis=0)
        for dr in (-1, 0, 1) for dc in (-1, 0, 1)]).astype(jnp.bfloat16)
    bdc = jnp.tile(bd.astype(jnp.float32), 4).reshape(4 * Cout, 1)

    y = pl.pallas_call(
        _make_upblock_kernel(H, Wg),
        out_shape=jax.ShapeDtypeStruct((N, 4 * Cout, Lv), jnp.float32),
        grid=(N,),
        in_specs=[
            pl.BlockSpec((1, Cin, Lv), lambda n: (n, 0, 0)),
            pl.BlockSpec((1, Lv), lambda n: (0, 0)),
            pl.BlockSpec((Cin, Cin), lambda n: (0, 0)),
            pl.BlockSpec((Cin, 1), lambda n: (0, 0)),
            pl.BlockSpec((9, Cout, Cin), lambda n: (0, 0, 0)),
            pl.BlockSpec((Cout, 1), lambda n: (0, 0)),
            pl.BlockSpec((9, 4 * Cout, Cout), lambda n: (0, 0, 0)),
            pl.BlockSpec((4 * Cout, 1), lambda n: (0, 0)),
        ],
        out_specs=pl.BlockSpec((1, 4 * Cout, Lv), lambda n: (n, 0, 0)),
        scratch_shapes=[
            pltpu.VMEM((Cin, Lbuf), jnp.bfloat16),   # h1 (+2 zero rows/side)
            pltpu.VMEM((Cout, Lbuf), jnp.bfloat16),  # h2 (+2 zero rows/side)
        ],
        compiler_params=pltpu.CompilerParams(
            dimension_semantics=("parallel",),
            vmem_limit_bytes=48 * 1024 * 1024),
    )(xg, mask, w1, b1c, w3t, b3c, wdt, bdc)

    # Parity interleave + column crop: pure XLA layout work at HBM bandwidth.
    # y[n, (2a+b)*Cout + co, r*Wg + cg] == out[n, co, 2r+a, 2(cg-2)+b]
    y = y.reshape(N, 2, 2, Cout, H, Wg)[:, :, :, :, :, 2:W + 2]
    y = jnp.transpose(y, (0, 3, 4, 1, 5, 2)).reshape(N, Cout, 2 * H, 2 * W)
    return y


# ------------------------------------------------------------ pure-JAX ref ---

def reference_upblock(x_nchw, w1_pt, b1, w3_pt, b3, wd_pt, bd):
    dn = ("NCHW", "OIHW", "NCHW")
    h1 = jax.lax.conv_general_dilated(x_nchw, w1_pt, (1, 1), "VALID",
                                      dimension_numbers=dn)
    h1 = jnp.maximum(h1 + b1.reshape(1, -1, 1, 1), 0.0)
    h2 = jax.lax.conv_general_dilated(h1, w3_pt, (1, 1), ((1, 1), (1, 1)),
                                      dimension_numbers=dn)
    h2 = jnp.maximum(h2 + b3.reshape(1, -1, 1, 1), 0.0)
    # ConvTranspose2d == conv with lhs_dilation=stride, pad k-1-p, flipped
    # kernel with in/out channels swapped.
    wd_conv = jnp.transpose(wd_pt, (1, 0, 2, 3))[:, :, ::-1, ::-1]
    y = jax.lax.conv_general_dilated(h2, wd_conv, (1, 1), ((2, 2), (2, 2)),
                                     lhs_dilation=(2, 2), dimension_numbers=dn)
    return y + bd.reshape(1, -1, 1, 1)


# -------------------------------------------------------------------- main ---

if __name__ == "__main__":
    N, Cin, Cout, H, W = 2, 8, 4, 16, 16

    key = jax.random.PRNGKey(0)
    k = jax.random.split(key, 7)
    x_nchw = jax.random.normal(k[0], (N, Cin, H, W), jnp.float32)
    # Deterministic synthetic parameters (PyTorch parameter shapes).
    w1_pt = 0.2 * jax.random.normal(k[1], (Cin, Cin, 1, 1), jnp.float32)
    b1 = 0.1 * jax.random.normal(k[2], (Cin,), jnp.float32)
    w3_pt = 0.2 * jax.random.normal(k[3], (Cout, Cin, 3, 3), jnp.float32)
    b3 = 0.1 * jax.random.normal(k[4], (Cout,), jnp.float32)
    wd_pt = 0.2 * jax.random.normal(k[5], (Cout, Cout, 4, 4), jnp.float32)
    bd = 0.1 * jax.random.normal(k[6], (Cout,), jnp.float32)

    y = up_block_forward(x_nchw, w1_pt, b1, w3_pt, b3, wd_pt, bd)
    y = jax.block_until_ready(y)
    assert y.shape == (N, Cout, 2 * H, 2 * W), y.shape

    # Reference at the same bf16 operand precision the kernel feeds the MXU
    # (biases / accumulation stay f32 in both).
    def _q(a):
        return a.astype(jnp.bfloat16).astype(jnp.float32)

    y_ref = reference_upblock(_q(x_nchw), _q(w1_pt), b1, _q(w3_pt), b3,
                              _q(wd_pt), bd)
    err = float(jnp.max(jnp.abs(y - y_ref)))
    assert err < 5e-2, err

    print("KERNEL_OK")
</pallas_src>

<mosaic_0001>
module attributes {stable_mosaic.version = 11 : i64} {
  func.func @kernel(%arg0: i32, %arg1: memref<1x8x320xbf16, #tpu.memory_space<vmem>>, %arg2: memref<1x320xf32, #tpu.memory_space<vmem>>, %arg3: memref<8x8xbf16, #tpu.memory_space<vmem>>, %arg4: memref<8x1xf32, #tpu.memory_space<vmem>>, %arg5: memref<9x4x8xbf16, #tpu.memory_space<vmem>>, %arg6: memref<4x1xf32, #tpu.memory_space<vmem>>, %arg7: memref<9x16x4xbf16, #tpu.memory_space<vmem>>, %arg8: memref<16x1xf32, #tpu.memory_space<vmem>>, %arg9: memref<1x16x320xf32, #tpu.memory_space<vmem>>, %arg10: memref<8x400xbf16, #tpu.memory_space<vmem>>, %arg11: memref<4x400xbf16, #tpu.memory_space<vmem>>) attributes {dimension_semantics = [#tpu.dimension_semantics<parallel>], iteration_bounds = array<i64: 2>, scalar_prefetch = 0 : i64, scratch_operands = 2 : i64, tpu.core_type = #tpu.core_type<tc>, window_params = [{transform_indices = @transform_0, window_bounds = array<i64: 1, 8, 320>}, {pipeline_mode = #tpu.pipeline_mode<synchronous>, transform_indices = @transform_1, window_bounds = array<i64: 1, 320>}, {pipeline_mode = #tpu.pipeline_mode<synchronous>, transform_indices = @transform_2, window_bounds = array<i64: 8, 8>}, {pipeline_mode = #tpu.pipeline_mode<synchronous>, transform_indices = @transform_3, window_bounds = array<i64: 8, 1>}, {pipeline_mode = #tpu.pipeline_mode<synchronous>, transform_indices = @transform_4, window_bounds = array<i64: 9, 4, 8>}, {pipeline_mode = #tpu.pipeline_mode<synchronous>, transform_indices = @transform_5, window_bounds = array<i64: 4, 1>}, {pipeline_mode = #tpu.pipeline_mode<synchronous>, transform_indices = @transform_6, window_bounds = array<i64: 9, 16, 4>}, {pipeline_mode = #tpu.pipeline_mode<synchronous>, transform_indices = @transform_7, window_bounds = array<i64: 16, 1>}, {transform_indices = @transform_8, window_bounds = array<i64: 1, 16, 320>}]} {
    %c0 = arith.constant 0 : index
    %c0_0 = arith.constant 0 : index
    %0 = vector.load %arg2[%c0, %c0_0] : memref<1x320xf32, #tpu.memory_space<vmem>>, vector<1x320xf32>
    %cst = arith.constant 0.000000e+00 : bf16
    %1 = vector.broadcast %cst : bf16 to vector<8x40xbf16>
    %c0_1 = arith.constant 0 : index
    %c0_2 = arith.constant 0 : index
    %2 = vector.load %arg10[%c0_1, %c0_2] : memref<8x400xbf16, #tpu.memory_space<vmem>>, vector<8x40xbf16>
    tpu.vector_store %arg10[%c0_1, %c0_2], %1 {strides = array<i32>} : memref<8x400xbf16, #tpu.memory_space<vmem>>, vector<8x40xbf16>,
    %c0_3 = arith.constant 0 : index
    %c360 = arith.constant 360 : index
    %3 = vector.load %arg10[%c0_3, %c360] : memref<8x400xbf16, #tpu.memory_space<vmem>>, vector<8x40xbf16>
    tpu.vector_store %arg10[%c0_3, %c360], %1 {strides = array<i32>} : memref<8x400xbf16, #tpu.memory_space<vmem>>, vector<8x40xbf16>,
    %cst_4 = arith.constant 0.000000e+00 : bf16
    %4 = vector.broadcast %cst_4 : bf16 to vector<4x40xbf16>
    %c0_5 = arith.constant 0 : index
    %c0_6 = arith.constant 0 : index
    %5 = vector.load %arg11[%c0_5, %c0_6] : memref<4x400xbf16, #tpu.memory_space<vmem>>, vector<4x40xbf16>
    tpu.vector_store %arg11[%c0_5, %c0_6], %4 {strides = array<i32>} : memref<4x400xbf16, #tpu.memory_space<vmem>>, vector<4x40xbf16>,
    %c0_7 = arith.constant 0 : index
    %c360_8 = arith.constant 360 : index
    %6 = vector.load %arg11[%c0_7, %c360_8] : memref<4x400xbf16, #tpu.memory_space<vmem>>, vector<4x40xbf16>
    tpu.vector_store %arg11[%c0_7, %c360_8], %4 {strides = array<i32>} : memref<4x400xbf16, #tpu.memory_space<vmem>>, vector<4x40xbf16>,
    %c0_9 = arith.constant 0 : index
    %c0_10 = arith.constant 0 : index
    %7 = vector.load %arg3[%c0_9, %c0_10] : memref<8x8xbf16, #tpu.memory_space<vmem>>, vector<8x8xbf16>
    %c0_11 = arith.constant 0 : index
    %c0_12 = arith.constant 0 : index
    %c0_13 = arith.constant 0 : index
    %8 = vector.load %arg1[%c0_11, %c0_12, %c0_13] : memref<1x8x320xbf16, #tpu.memory_space<vmem>>, vector<1x8x320xbf16>
    %9 = vector.shape_cast %8 : vector<1x8x320xbf16> to vector<8x320xbf16>
    %cst_14 = arith.constant dense<0.000000e+00> : vector<8x320xf32>
    %10 = tpu.matmul %7, %9, %cst_14 {dimension_numbers = #tpu.dot_dimension_numbers<[1], [0], [0], [1], [0, 0, 1, 1], [], []>} : vector<8x8xbf16>, vector<8x320xbf16>, vector<8x320xf32> -> vector<8x320xf32>
    %c0_15 = arith.constant 0 : index
    %c0_16 = arith.constant 0 : index
    %11 = vector.load %arg4[%c0_15, %c0_16] : memref<8x1xf32, #tpu.memory_space<vmem>>, vector<8x1xf32>
    %12 = vector.broadcast %11 : vector<8x1xf32> to vector<8x320xf32>
    %13 = arith.addf %10, %12 : vector<8x320xf32>
    %cst_17 = arith.constant 0.000000e+00 : f32
    %14 = vector.broadcast %cst_17 : f32 to vector<8x320xf32>
    %15 = arith.maximumf %13, %14 : vector<8x320xf32>
    %16 = vector.broadcast %0 : vector<1x320xf32> to vector<8x320xf32>
    %17 = arith.mulf %15, %16 : vector<8x320xf32>
    %18 = arith.truncf %17 : vector<8x320xf32> to vector<8x320xbf16>
    %c0_18 = arith.constant 0 : index
    %c40 = arith.constant 40 : index
    %19 = vector.load %arg10[%c0_18, %c40] : memref<8x400xbf16, #tpu.memory_space<vmem>>, vector<8x320xbf16>
    tpu.vector_store %arg10[%c0_18, %c40], %18 {strides = array<i32>} : memref<8x400xbf16, #tpu.memory_space<vmem>>, vector<8x320xbf16>,
    %c0_19 = arith.constant 0 : index
    %c0_20 = arith.constant 0 : index
    %c0_21 = arith.constant 0 : index
    %20 = vector.load %arg5[%c0_19, %c0_20, %c0_21] : memref<9x4x8xbf16, #tpu.memory_space<vmem>>, vector<1x4x8xbf16>
    %21 = vector.shape_cast %20 : vector<1x4x8xbf16> to vector<4x8xbf16>
    %c0_22 = arith.constant 0 : index
    %c19 = arith.constant 19 : index
    %22 = vector.load %arg10[%c0_22, %c19] : memref<8x400xbf16, #tpu.memory_space<vmem>>, vector<8x320xbf16>
    %cst_23 = arith.constant dense<0.000000e+00> : vector<4x320xf32>
    %23 = tpu.matmul %21, %22, %cst_23 {dimension_numbers = #tpu.dot_dimension_numbers<[1], [0], [0], [1], [0, 0, 1, 1], [], []>} : vector<4x8xbf16>, vector<8x320xbf16>, vector<4x320xf32> -> vector<4x320xf32>
    %c1 = arith.constant 1 : index
    %c0_24 = arith.constant 0 : index
    %c0_25 = arith.constant 0 : index
    %24 = vector.load %arg5[%c1, %c0_24, %c0_25] : memref<9x4x8xbf16, #tpu.memory_space<vmem>>, vector<1x4x8xbf16>
    %25 = vector.shape_cast %24 : vector<1x4x8xbf16> to vector<4x8xbf16>
    %c0_26 = arith.constant 0 : index
    %c20 = arith.constant 20 : index
    %26 = vector.load %arg10[%c0_26, %c20] : memref<8x400xbf16, #tpu.memory_space<vmem>>, vector<8x320xbf16>
    %cst_27 = arith.constant dense<0.000000e+00> : vector<4x320xf32>
    %27 = tpu.matmul %25, %26, %cst_27 {dimension_numbers = #tpu.dot_dimension_numbers<[1], [0], [0], [1], [0, 0, 1, 1], [], []>} : vector<4x8xbf16>, vector<8x320xbf16>, vector<4x320xf32> -> vector<4x320xf32>
    %28 = arith.addf %23, %27 : vector<4x320xf32>
    %c2 = arith.constant 2 : index
    %c0_28 = arith.constant 0 : index
    %c0_29 = arith.constant 0 : index
    %29 = vector.load %arg5[%c2, %c0_28, %c0_29] : memref<9x4x8xbf16, #tpu.memory_space<vmem>>, vector<1x4x8xbf16>
    %30 = vector.shape_cast %29 : vector<1x4x8xbf16> to vector<4x8xbf16>
    %c0_30 = arith.constant 0 : index
    %c21 = arith.constant 21 : index
    %31 = vector.load %arg10[%c0_30, %c21] : memref<8x400xbf16, #tpu.memory_space<vmem>>, vector<8x320xbf16>
    %cst_31 = arith.constant dense<0.000000e+00> : vector<4x320xf32>
    %32 = tpu.matmul %30, %31, %cst_31 {dimension_numbers = #tpu.dot_dimension_numbers<[1], [0], [0], [1], [0, 0, 1, 1], [], []>} : vector<4x8xbf16>, vector<8x320xbf16>, vector<4x320xf32> -> vector<4x320xf32>
    %33 = arith.addf %28, %32 : vector<4x320xf32>
    %c3 = arith.constant 3 : index
    %c0_32 = arith.constant 0 : index
    %c0_33 = arith.constant 0 : index
    %34 = vector.load %arg5[%c3, %c0_32, %c0_33] : memref<9x4x8xbf16, #tpu.memory_space<vmem>>, vector<1x4x8xbf16>
    %35 = vector.shape_cast %34 : vector<1x4x8xbf16> to vector<4x8xbf16>
    %c0_34 = arith.constant 0 : index
    %c39 = arith.constant 39 : index
    %36 = vector.load %arg10[%c0_34, %c39] : memref<8x400xbf16, #tpu.memory_space<vmem>>, vector<8x320xbf16>
    %cst_35 = arith.constant dense<0.000000e+00> : vector<4x320xf32>
    %37 = tpu.matmul %35, %36, %cst_35 {dimension_numbers = #tpu.dot_dimension_numbers<[1], [0], [0], [1], [0, 0, 1, 1], [], []>} : vector<4x8xbf16>, vector<8x320xbf16>, vector<4x320xf32> -> vector<4x320xf32>
    %38 = arith.addf %33, %37 : vector<4x320xf32>
    %c4 = arith.constant 4 : index
    %c0_36 = arith.constant 0 : index
    %c0_37 = arith.constant 0 : index
    %39 = vector.load %arg5[%c4, %c0_36, %c0_37] : memref<9x4x8xbf16, #tpu.memory_space<vmem>>, vector<1x4x8xbf16>
    %40 = vector.shape_cast %39 : vector<1x4x8xbf16> to vector<4x8xbf16>
    %c0_38 = arith.constant 0 : index
    %c40_39 = arith.constant 40 : index
    %41 = vector.load %arg10[%c0_38, %c40_39] : memref<8x400xbf16, #tpu.memory_space<vmem>>, vector<8x320xbf16>
    %cst_40 = arith.constant dense<0.000000e+00> : vector<4x320xf32>
    %42 = tpu.matmul %40, %41, %cst_40 {dimension_numbers = #tpu.dot_dimension_numbers<[1], [0], [0], [1], [0, 0, 1, 1], [], []>} : vector<4x8xbf16>, vector<8x320xbf16>, vector<4x320xf32> -> vector<4x320xf32>
    %43 = arith.addf %38, %42 : vector<4x320xf32>
    %c5 = arith.constant 5 : index
    %c0_41 = arith.constant 0 : index
    %c0_42 = arith.constant 0 : index
    %44 = vector.load %arg5[%c5, %c0_41, %c0_42] : memref<9x4x8xbf16, #tpu.memory_space<vmem>>, vector<1x4x8xbf16>
    %45 = vector.shape_cast %44 : vector<1x4x8xbf16> to vector<4x8xbf16>
    %c0_43 = arith.constant 0 : index
    %c41 = arith.constant 41 : index
    %46 = vector.load %arg10[%c0_43, %c41] : memref<8x400xbf16, #tpu.memory_space<vmem>>, vector<8x320xbf16>
    %cst_44 = arith.constant dense<0.000000e+00> : vector<4x320xf32>
    %47 = tpu.matmul %45, %46, %cst_44 {dimension_numbers = #tpu.dot_dimension_numbers<[1], [0], [0], [1], [0, 0, 1, 1], [], []>} : vector<4x8xbf16>, vector<8x320xbf16>, vector<4x320xf32> -> vector<4x320xf32>
    %48 = arith.addf %43, %47 : vector<4x320xf32>
    %c6 = arith.constant 6 : index
    %c0_45 = arith.constant 0 : index
    %c0_46 = arith.constant 0 : index
    %49 = vector.load %arg5[%c6, %c0_45, %c0_46] : memref<9x4x8xbf16, #tpu.memory_space<vmem>>, vector<1x4x8xbf16>
    %50 = vector.shape_cast %49 : vector<1x4x8xbf16> to vector<4x8xbf16>
    %c0_47 = arith.constant 0 : index
    %c59 = arith.constant 59 : index
    %51 = vector.load %arg10[%c0_47, %c59] : memref<8x400xbf16, #tpu.memory_space<vmem>>, vector<8x320xbf16>
    %cst_48 = arith.constant dense<0.000000e+00> : vector<4x320xf32>
    %52 = tpu.matmul %50, %51, %cst_48 {dimension_numbers = #tpu.dot_dimension_numbers<[1], [0], [0], [1], [0, 0, 1, 1], [], []>} : vector<4x8xbf16>, vector<8x320xbf16>, vector<4x320xf32> -> vector<4x320xf32>
    %53 = arith.addf %48, %52 : vector<4x320xf32>
    %c7 = arith.constant 7 : index
    %c0_49 = arith.constant 0 : index
    %c0_50 = arith.constant 0 : index
    %54 = vector.load %arg5[%c7, %c0_49, %c0_50] : memref<9x4x8xbf16, #tpu.memory_space<vmem>>, vector<1x4x8xbf16>
    %55 = vector.shape_cast %54 : vector<1x4x8xbf16> to vector<4x8xbf16>
    %c0_51 = arith.constant 0 : index
    %c60 = arith.constant 60 : index
    %56 = vector.load %arg10[%c0_51, %c60] : memref<8x400xbf16, #tpu.memory_space<vmem>>, vector<8x320xbf16>
    %cst_52 = arith.constant dense<0.000000e+00> : vector<4x320xf32>
    %57 = tpu.matmul %55, %56, %cst_52 {dimension_numbers = #tpu.dot_dimension_numbers<[1], [0], [0], [1], [0, 0, 1, 1], [], []>} : vector<4x8xbf16>, vector<8x320xbf16>, vector<4x320xf32> -> vector<4x320xf32>
    %58 = arith.addf %53, %57 : vector<4x320xf32>
    %c8 = arith.constant 8 : index
    %c0_53 = arith.constant 0 : index
    %c0_54 = arith.constant 0 : index
    %59 = vector.load %arg5[%c8, %c0_53, %c0_54] : memref<9x4x8xbf16, #tpu.memory_space<vmem>>, vector<1x4x8xbf16>
    %60 = vector.shape_cast %59 : vector<1x4x8xbf16> to vector<4x8xbf16>
    %c0_55 = arith.constant 0 : index
    %c61 = arith.constant 61 : index
    %61 = vector.load %arg10[%c0_55, %c61] : memref<8x400xbf16, #tpu.memory_space<vmem>>, vector<8x320xbf16>
    %cst_56 = arith.constant dense<0.000000e+00> : vector<4x320xf32>
    %62 = tpu.matmul %60, %61, %cst_56 {dimension_numbers = #tpu.dot_dimension_numbers<[1], [0], [0], [1], [0, 0, 1, 1], [], []>} : vector<4x8xbf16>, vector<8x320xbf16>, vector<4x320xf32> -> vector<4x320xf32>
    %63 = arith.addf %58, %62 : vector<4x320xf32>
    %c0_57 = arith.constant 0 : index
    %c0_58 = arith.constant 0 : index
    %64 = vector.load %arg6[%c0_57, %c0_58] : memref<4x1xf32, #tpu.memory_space<vmem>>, vector<4x1xf32>
    %65 = vector.broadcast %64 : vector<4x1xf32> to vector<4x320xf32>
    %66 = arith.addf %63, %65 : vector<4x320xf32>
    %cst_59 = arith.constant 0.000000e+00 : f32
    %67 = vector.broadcast %cst_59 : f32 to vector<4x320xf32>
    %68 = arith.maximumf %66, %67 : vector<4x320xf32>
    %69 = vector.broadcast %0 : vector<1x320xf32> to vector<4x320xf32>
    %70 = arith.mulf %68, %69 : vector<4x320xf32>
    %71 = arith.truncf %70 : vector<4x320xf32> to vector<4x320xbf16>
    %c0_60 = arith.constant 0 : index
    %c40_61 = arith.constant 40 : index
    %72 = vector.load %arg11[%c0_60, %c40_61] : memref<4x400xbf16, #tpu.memory_space<vmem>>, vector<4x320xbf16>
    tpu.vector_store %arg11[%c0_60, %c40_61], %71 {strides = array<i32>} : memref<4x400xbf16, #tpu.memory_space<vmem>>, vector<4x320xbf16>,
    %c0_62 = arith.constant 0 : index
    %c0_63 = arith.constant 0 : index
    %c0_64 = arith.constant 0 : index
    %73 = vector.load %arg7[%c0_62, %c0_63, %c0_64] : memref<9x16x4xbf16, #tpu.memory_space<vmem>>, vector<1x16x4xbf16>
    %74 = vector.shape_cast %73 : vector<1x16x4xbf16> to vector<16x4xbf16>
    %c0_65 = arith.constant 0 : index
    %c19_66 = arith.constant 19 : index
    %75 = vector.load %arg11[%c0_65, %c19_66] : memref<4x400xbf16, #tpu.memory_space<vmem>>, vector<4x320xbf16>
    %cst_67 = arith.constant dense<0.000000e+00> : vector<16x320xf32>
    %76 = tpu.matmul %74, %75, %cst_67 {dimension_numbers = #tpu.dot_dimension_numbers<[1], [0], [0], [1], [0, 0, 1, 1], [], []>} : vector<16x4xbf16>, vector<4x320xbf16>, vector<16x320xf32> -> vector<16x320xf32>
    %c1_68 = arith.constant 1 : index
    %c0_69 = arith.constant 0 : index
    %c0_70 = arith.constant 0 : index
    %77 = vector.load %arg7[%c1_68, %c0_69, %c0_70] : memref<9x16x4xbf16, #tpu.memory_space<vmem>>, vector<1x16x4xbf16>
    %78 = vector.shape_cast %77 : vector<1x16x4xbf16> to vector<16x4xbf16>
    %c0_71 = arith.constant 0 : index
    %c20_72 = arith.constant 20 : index
    %79 = vector.load %arg11[%c0_71, %c20_72] : memref<4x400xbf16, #tpu.memory_space<vmem>>, vector<4x320xbf16>
    %cst_73 = arith.constant dense<0.000000e+00> : vector<16x320xf32>
    %80 = tpu.matmul %78, %79, %cst_73 {dimension_numbers = #tpu.dot_dimension_numbers<[1], [0], [0], [1], [0, 0, 1, 1], [], []>} : vector<16x4xbf16>, vector<4x320xbf16>, vector<16x320xf32> -> vector<16x320xf32>
    %81 = arith.addf %76, %80 : vector<16x320xf32>
    %c2_74 = arith.constant 2 : index
    %c0_75 = arith.constant 0 : index
    %c0_76 = arith.constant 0 : index
    %82 = vector.load %arg7[%c2_74, %c0_75, %c0_76] : memref<9x16x4xbf16, #tpu.memory_space<vmem>>, vector<1x16x4xbf16>
    %83 = vector.shape_cast %82 : vector<1x16x4xbf16> to vector<16x4xbf16>
    %c0_77 = arith.constant 0 : index
    %c21_78 = arith.constant 21 : index
    %84 = vector.load %arg11[%c0_77, %c21_78] : memref<4x400xbf16, #tpu.memory_space<vmem>>, vector<4x320xbf16>
    %cst_79 = arith.constant dense<0.000000e+00> : vector<16x320xf32>
    %85 = tpu.matmul %83, %84, %cst_79 {dimension_numbers = #tpu.dot_dimension_numbers<[1], [0], [0], [1], [0, 0, 1, 1], [], []>} : vector<16x4xbf16>, vector<4x320xbf16>, vector<16x320xf32> -> vector<16x320xf32>
    %86 = arith.addf %81, %85 : vector<16x320xf32>
    %c3_80 = arith.constant 3 : index
    %c0_81 = arith.constant 0 : index
    %c0_82 = arith.constant 0 : index
    %87 = vector.load %arg7[%c3_80, %c0_81, %c0_82] : memref<9x16x4xbf16, #tpu.memory_space<vmem>>, vector<1x16x4xbf16>
    %88 = vector.shape_cast %87 : vector<1x16x4xbf16> to vector<16x4xbf16>
    %c0_83 = arith.constant 0 : index
    %c39_84 = arith.constant 39 : index
    %89 = vector.load %arg11[%c0_83, %c39_84] : memref<4x400xbf16, #tpu.memory_space<vmem>>, vector<4x320xbf16>
    %cst_85 = arith.constant dense<0.000000e+00> : vector<16x320xf32>
    %90 = tpu.matmul %88, %89, %cst_85 {dimension_numbers = #tpu.dot_dimension_numbers<[1], [0], [0], [1], [0, 0, 1, 1], [], []>} : vector<16x4xbf16>, vector<4x320xbf16>, vector<16x320xf32> -> vector<16x320xf32>
    %91 = arith.addf %86, %90 : vector<16x320xf32>
    %c4_86 = arith.constant 4 : index
    %c0_87 = arith.constant 0 : index
    %c0_88 = arith.constant 0 : index
    %92 = vector.load %arg7[%c4_86, %c0_87, %c0_88] : memref<9x16x4xbf16, #tpu.memory_space<vmem>>, vector<1x16x4xbf16>
    %93 = vector.shape_cast %92 : vector<1x16x4xbf16> to vector<16x4xbf16>
    %c0_89 = arith.constant 0 : index
    %c40_90 = arith.constant 40 : index
    %94 = vector.load %arg11[%c0_89, %c40_90] : memref<4x400xbf16, #tpu.memory_space<vmem>>, vector<4x320xbf16>
    %cst_91 = arith.constant dense<0.000000e+00> : vector<16x320xf32>
    %95 = tpu.matmul %93, %94, %cst_91 {dimension_numbers = #tpu.dot_dimension_numbers<[1], [0], [0], [1], [0, 0, 1, 1], [], []>} : vector<16x4xbf16>, vector<4x320xbf16>, vector<16x320xf32> -> vector<16x320xf32>
    %96 = arith.addf %91, %95 : vector<16x320xf32>
    %c5_92 = arith.constant 5 : index
    %c0_93 = arith.constant 0 : index
    %c0_94 = arith.constant 0 : index
    %97 = vector.load %arg7[%c5_92, %c0_93, %c0_94] : memref<9x16x4xbf16, #tpu.memory_space<vmem>>, vector<1x16x4xbf16>
    %98 = vector.shape_cast %97 : vector<1x16x4xbf16> to vector<16x4xbf16>
    %c0_95 = arith.constant 0 : index
    %c41_96 = arith.constant 41 : index
    %99 = vector.load %arg11[%c0_95, %c41_96] : memref<4x400xbf16, #tpu.memory_space<vmem>>, vector<4x320xbf16>
    %cst_97 = arith.constant dense<0.000000e+00> : vector<16x320xf32>
    %100 = tpu.matmul %98, %99, %cst_97 {dimension_numbers = #tpu.dot_dimension_numbers<[1], [0], [0], [1], [0, 0, 1, 1], [], []>} : vector<16x4xbf16>, vector<4x320xbf16>, vector<16x320xf32> -> vector<16x320xf32>
    %101 = arith.addf %96, %100 : vector<16x320xf32>
    %c6_98 = arith.constant 6 : index
    %c0_99 = arith.constant 0 : index
    %c0_100 = arith.constant 0 : index
    %102 = vector.load %arg7[%c6_98, %c0_99, %c0_100] : memref<9x16x4xbf16, #tpu.memory_space<vmem>>, vector<1x16x4xbf16>
    %103 = vector.shape_cast %102 : vector<1x16x4xbf16> to vector<16x4xbf16>
    %c0_101 = arith.constant 0 : index
    %c59_102 = arith.constant 59 : index
    %104 = vector.load %arg11[%c0_101, %c59_102] : memref<4x400xbf16, #tpu.memory_space<vmem>>, vector<4x320xbf16>
    %cst_103 = arith.constant dense<0.000000e+00> : vector<16x320xf32>
    %105 = tpu.matmul %103, %104, %cst_103 {dimension_numbers = #tpu.dot_dimension_numbers<[1], [0], [0], [1], [0, 0, 1, 1], [], []>} : vector<16x4xbf16>, vector<4x320xbf16>, vector<16x320xf32> -> vector<16x320xf32>
    %106 = arith.addf %101, %105 : vector<16x320xf32>
    %c7_104 = arith.constant 7 : index
    %c0_105 = arith.constant 0 : index
    %c0_106 = arith.constant 0 : index
    %107 = vector.load %arg7[%c7_104, %c0_105, %c0_106] : memref<9x16x4xbf16, #tpu.memory_space<vmem>>, vector<1x16x4xbf16>
    %108 = vector.shape_cast %107 : vector<1x16x4xbf16> to vector<16x4xbf16>
    %c0_107 = arith.constant 0 : index
    %c60_108 = arith.constant 60 : index
    %109 = vector.load %arg11[%c0_107, %c60_108] : memref<4x400xbf16, #tpu.memory_space<vmem>>, vector<4x320xbf16>
    %cst_109 = arith.constant dense<0.000000e+00> : vector<16x320xf32>
    %110 = tpu.matmul %108, %109, %cst_109 {dimension_numbers = #tpu.dot_dimension_numbers<[1], [0], [0], [1], [0, 0, 1, 1], [], []>} : vector<16x4xbf16>, vector<4x320xbf16>, vector<16x320xf32> -> vector<16x320xf32>
    %111 = arith.addf %106, %110 : vector<16x320xf32>
    %c8_110 = arith.constant 8 : index
    %c0_111 = arith.constant 0 : index
    %c0_112 = arith.constant 0 : index
    %112 = vector.load %arg7[%c8_110, %c0_111, %c0_112] : memref<9x16x4xbf16, #tpu.memory_space<vmem>>, vector<1x16x4xbf16>
    %113 = vector.shape_cast %112 : vector<1x16x4xbf16> to vector<16x4xbf16>
    %c0_113 = arith.constant 0 : index
    %c61_114 = arith.constant 61 : index
    %114 = vector.load %arg11[%c0_113, %c61_114] : memref<4x400xbf16, #tpu.memory_space<vmem>>, vector<4x320xbf16>
    %cst_115 = arith.constant dense<0.000000e+00> : vector<16x320xf32>
    %115 = tpu.matmul %113, %114, %cst_115 {dimension_numbers = #tpu.dot_dimension_numbers<[1], [0], [0], [1], [0, 0, 1, 1], [], []>} : vector<16x4xbf16>, vector<4x320xbf16>, vector<16x320xf32> -> vector<16x320xf32>
    %116 = arith.addf %111, %115 : vector<16x320xf32>
    %c0_116 = arith.constant 0 : index
    %c0_117 = arith.constant 0 : index
    %117 = vector.load %arg8[%c0_116, %c0_117] : memref<16x1xf32, #tpu.memory_space<vmem>>, vector<16x1xf32>
    %118 = vector.broadcast %117 : vector<16x1xf32> to vector<16x320xf32>
    %119 = arith.addf %116, %118 : vector<16x320xf32>
    %c0_118 = arith.constant 0 : index
    %c0_119 = arith.constant 0 : index
    %c0_120 = arith.constant 0 : index
    %120 = vector.load %arg9[%c0_118, %c0_119, %c0_120] : memref<1x16x320xf32, #tpu.memory_space<vmem>>, vector<1x16x320xf32>
    %121 = vector.shape_cast %120 : vector<1x16x320xf32> to vector<16x320xf32>
    %122 = vector.shape_cast %119 : vector<16x320xf32> to vector<1x16x320xf32>
    tpu.vector_store %arg9[%c0_118, %c0_119, %c0_120], %122 {strides = array<i32>} : memref<1x16x320xf32, #tpu.memory_space<vmem>>, vector<1x16x320xf32>,
    return
  }
  func.func @transform_0(%arg0: i32) -> (i32, i32, i32) {
    %c0_i32 = arith.constant 0 : i32
    %c0_i32_0 = arith.constant 0 : i32
    %c0_i32_1 = arith.constant 0 : i32
    return %arg0, %c0_i32, %c0_i32_0 : i32, i32, i32
  }
  func.func @transform_1(%arg0: i32) -> (i32, i32) {
    %c0_i32 = arith.constant 0 : i32
    %c0_i32_0 = arith.constant 0 : i32
    %c0_i32_1 = arith.constant 0 : i32
    return %c0_i32, %c0_i32_0 : i32, i32
  }
  func.func @transform_2(%arg0: i32) -> (i32, i32) {
    %c0_i32 = arith.constant 0 : i32
    %c0_i32_0 = arith.constant 0 : i32
    %c0_i32_1 = arith.constant 0 : i32
    return %c0_i32, %c0_i32_0 : i32, i32
  }
  func.func @transform_3(%arg0: i32) -> (i32, i32) {
    %c0_i32 = arith.constant 0 : i32
    %c0_i32_0 = arith.constant 0 : i32
    %c0_i32_1 = arith.constant 0 : i32
    return %c0_i32, %c0_i32_0 : i32, i32
  }
  func.func @transform_4(%arg0: i32) -> (i32, i32, i32) {
    %c0_i32 = arith.constant 0 : i32
    %c0_i32_0 = arith.constant 0 : i32
    %c0_i32_1 = arith.constant 0 : i32
    %c0_i32_2 = arith.constant 0 : i32
    return %c0_i32, %c0_i32_0, %c0_i32_1 : i32, i32, i32
  }
  func.func @transform_5(%arg0: i32) -> (i32, i32) {
    %c0_i32 = arith.constant 0 : i32
    %c0_i32_0 = arith.constant 0 : i32
    %c0_i32_1 = arith.constant 0 : i32
    return %c0_i32, %c0_i32_0 : i32, i32
  }
  func.func @transform_6(%arg0: i32) -> (i32, i32, i32) {
    %c0_i32 = arith.constant 0 : i32
    %c0_i32_0 = arith.constant 0 : i32
    %c0_i32_1 = arith.constant 0 : i32
    %c0_i32_2 = arith.constant 0 : i32
    return %c0_i32, %c0_i32_0, %c0_i32_1 : i32, i32, i32
  }
  func.func @transform_7(%arg0: i32) -> (i32, i32) {
    %c0_i32 = arith.constant 0 : i32
    %c0_i32_0 = arith.constant 0 : i32
    %c0_i32_1 = arith.constant 0 : i32
    return %c0_i32, %c0_i32_0 : i32, i32
  }
  func.func @transform_8(%arg0: i32) -> (i32, i32, i32) {
    %c0_i32 = arith.constant 0 : i32
    %c0_i32_0 = arith.constant 0 : i32
    %c0_i32_1 = arith.constant 0 : i32
    return %arg0, %c0_i32, %c0_i32_0 : i32, i32, i32
  }
}

</mosaic_0001>

<llo_original>
// kernel: tile.8
$region0: #{tile.8}
  #allocation0 [shape = 's32[1]{0}', space=sflag, size = 0x4, scoped, tag = 'scoped memory for tile.8']
  %s0 = inlined_call_operand.vmem [shape: f32[4], index: 0, kind: input, shape index: {}]
  %s1 = inlined_call_operand.vmem [shape: f32[4,4], index: 1, kind: output, shape index: {}]
  // Predicated region
  $region2: #{tile.8} parent=0 // pred_check
    _
  $region3: #{tile.8} parent=0 // pred_check_branch
    %3 = sbr.rel (0) target = $region5
  $region4: #{tile.8} parent=0 // pred_region
    _
  $region5: #{tile.8} parent=0 // pred_fallthru
    _
  %v4 = vld [vmem:[%s0] ss:$0 sm:$0xff]
  %5 = vst [vmem:[%s1] sm:$0xf] %v4

// kernel: tile.0
$region0: #{tile.0}
  %s0 = inlined_call_operand.vmem [shape: f32[4,4], index: 0, kind: input, shape index: {}]
  %s1 = inlined_call_operand.vmem [shape: f32[16,1], index: 1, kind: output, shape index: {}]
  $region1: #{tile.0} parent=0
    #allocation0 [shape = 'u8[4096]{0}', space=vmem, size = 0x1000, scoped, tag = 'scoped mem for input reshape']
    %s3 = sshll.u32 1, 4
    %s4 = ssub.s32 %s3, 1
    %v5 = vld [vmem:[%s0] sm:%s4]
    %6 = vst [vmem:[#allocation0] sm:%s4] %v5
    %v7 = vld [vmem:[#allocation0] sm:$0xf]
    %vm8 = vcmask 7168
    %9 = vst.msk [vmem:[%s1] ss:$4 sm:$0xf] %vm8, %v7
    %v10 = vld [vmem:[#allocation0] sm:$0xf]
    %11 = vrot.lane.b32.xlu0 %v10, 127
    %v12 = vpop.permute.xlu0 %11
    %vm13 = vcmask 7168
    %s14 = scalar_lea.vmem %s1, 1
    %15 = vst.msk [vmem:[%s14] ss:$4 sm:$0xf] %vm13, %v12
    %v16 = vld [vmem:[#allocation0] sm:$0xf]
    %17 = vrot.lane.b32.xlu0 %v16, 126
    %v18 = vpop.permute.xlu0 %17
    %vm19 = vcmask 7168
    %s20 = scalar_lea.vmem %s1, 2
    %21 = vst.msk [vmem:[%s20] ss:$4 sm:$0xf] %vm19, %v18
    %v22 = vld [vmem:[#allocation0] sm:$0xf]
    %23 = vrot.lane.b32.xlu0 %v22, 125
    %v24 = vpop.permute.xlu0 %23
    %vm25 = vcmask 7168
    %s26 = scalar_lea.vmem %s1, 3
    %27 = vst.msk [vmem:[%s26] ss:$4 sm:$0xf] %vm25, %v24

// kernel: up_block_forward.1
$region0: #{up_block_forward.1}
  #allocation0 [shape = 'u32[]', space=smem, size = 0x4, offset = 0x4, fixed_abs, tag = 'smem constant byte address 0x4 - core index']
  #allocation1 [shape = 'u32[144,128]{1,0:T(1,128)}', space=vmem, size = 0x12000, scoped, tag = 'internal scratch']
  #allocation2 [shape = 'bf16[8,400]{1,0:T(8,128)(2,1)}', space=vmem, size = 0x2000, scoped, tag = 'scratch operand']
  #allocation3 [shape = 'bf16[4,400]{1,0:T(4,128)(2,1)}', space=vmem, size = 0x1000, scoped, tag = 'scratch operand']
  %s0 = inlined_call_operand.vmem [shape: bf16[2,8,320], index: 0, kind: input, shape index: {}]
  %s1 = inlined_call_operand.vmem [shape: f32[1,320], index: 1, kind: input, shape index: {}]
  %s2 = inlined_call_operand.vmem [shape: bf16[8,8], index: 2, kind: input, shape index: {}]
  %s3 = inlined_call_operand.vmem [shape: f32[8,1], index: 3, kind: input, shape index: {}]
  %s4 = inlined_call_operand.vmem [shape: bf16[9,4,8], index: 4, kind: input, shape index: {}]
  %s5 = inlined_call_operand.vmem [shape: f32[4,1], index: 5, kind: input, shape index: {}]
  %s6 = inlined_call_operand.vmem [shape: bf16[9,16,4], index: 6, kind: input, shape index: {}]
  %s7 = inlined_call_operand.vmem [shape: f32[16,1], index: 7, kind: input, shape index: {}]
  %s8 = inlined_call_operand.vmem [shape: f32[2,16,320], index: 8, kind: output, shape index: {}]
  %s9 = sld [smem:[#allocation0]]
  $region65: #{up_block_forward.1} parent=0
    _
  %s11 = ssub.s32 1, %s9
  %s12 = scalar_select 0, %s11, %s9
  loop: start=0, step=1, limit=4
  $region2: #{up_block_forward.1} parent=0 // loop_pre_header
    _
  $region3: #{up_block_forward.1} parent=0 // loop_header
    %s14 = sphi 0, %s18
    %p15 = scmp.ge.s32.totalorder %s14, 4
    %s24 = sphi 0, %s26
    %s27 = sphi 0, %s24
    %s28 = sphi 0, %s27
    %s44 = sphi 0, %s28
    %s48 = sphi 0, %s48
    %s50 = sphi 0, %s48
    %s51 = sphi 0, %s50
    %s65 = sphi 0, %s51
    %s69 = sphi 0, %s69
    %s71 = sphi 0, %s69
    %s72 = sphi 0, %s71
    %s86 = sphi 0, %s72
    %s90 = sphi 0, %s90
    %s92 = sphi 0, %s90
    %s93 = sphi 0, %s92
    %s107 = sphi 0, %s93
    %s111 = sphi 0, %s111
    %s113 = sphi 0, %s111
    %s114 = sphi 0, %s113
    %s128 = sphi 0, %s114
    %s132 = sphi 0, %s132
    %s134 = sphi 0, %s132
    %s135 = sphi 0, %s134
    %s149 = sphi 0, %s135
    %s153 = sphi 0, %s153
    %s155 = sphi 0, %s153
    %s156 = sphi 0, %s155
    %s170 = sphi 0, %s156
    %s174 = sphi 0, %s174
    %s176 = sphi 0, %s174
    %s177 = sphi 0, %s176
    %s191 = sphi 0, %s177
    %s197 = sphi 0, %s199
    %s200 = sphi 0, %s197
    %s201 = sphi 0, %s200
    %s217 = sphi 0, %s201
  $region4: #{up_block_forward.1} parent=0 // loop_header_branch
    %17 = sbr.rel (%p15) target = $region8
  $region5: #{up_block_forward.1} parent=0 // loop_body
    %s19 = ssub.s32 %s14, 1
    %s20 = ssub.s32 %s14, 2
    %s21 = sadd.s32 %s14, 1
    %s22 = ssub.s32 %s14, %s21
    %p23 = scmp.eq.s32.totalorder %s22, 0
    %s25 = sadd.s32 %s24, 1
    %s26 = scalar_select %p23, %s24, %s25
    %p29 = pneg %p23
    %p30 = scmp.eq.s32.totalorder %s14, 1
    %p31 = por %p29, %p30
    %p32 = scmp.ne.s32.totalorder %s24, %s27
    %p33 = scmp.eq.s32.totalorder %s14, 0
    %p34 = por %p32, %p33
    %p35 = scmp.ne.s32.totalorder %s24, %s27
    %p36 = scmp.eq.s32.totalorder %s19, 1
    %p37 = por %p35, %p36
    %p38 = scmp.ne.s32.totalorder %s27, %s28
    %p39 = scmp.eq.s32.totalorder %s19, 0
    %p40 = por %p38, %p39
    %p41 = scmp.ne.s32.totalorder %s27, %s28
    %p42 = scmp.eq.s32.totalorder %s20, 1
    %p43 = por %p41, %p42
    %p45 = scmp.ne.s32.totalorder %s28, %s44
    %p46 = scmp.eq.s32.totalorder %s20, 0
    %p47 = por %p45, %p46
    %s49 = sadd.s32 %s48, 1
    %p52 = scmp.eq.s32.totalorder %s14, 1
    %p53 = scmp.ne.s32.totalorder %s48, %s50
    %p54 = scmp.eq.s32.totalorder %s14, 0
    %p55 = por %p53, %p54
    %p56 = scmp.ne.s32.totalorder %s48, %s50
    %p57 = scmp.eq.s32.totalorder %s19, 1
    %p58 = por %p56, %p57
    %p59 = scmp.ne.s32.totalorder %s50, %s51
    %p60 = scmp.eq.s32.totalorder %s19, 0
    %p61 = por %p59, %p60
    %p62 = scmp.ne.s32.totalorder %s50, %s51
    %p63 = scmp.eq.s32.totalorder %s20, 1
    %p64 = por %p62, %p63
    %p66 = scmp.ne.s32.totalorder %s51, %s65
    %p67 = scmp.eq.s32.totalorder %s20, 0
    %p68 = por %p66, %p67
    %s70 = sadd.s32 %s69, 1
    %p73 = scmp.eq.s32.totalorder %s14, 1
    %p74 = scmp.ne.s32.totalorder %s69, %s71
    %p75 = scmp.eq.s32.totalorder %s14, 0
    %p76 = por %p74, %p75
    %p77 = scmp.ne.s32.totalorder %s69, %s71
    %p78 = scmp.eq.s32.totalorder %s19, 1
    %p79 = por %p77, %p78
    %p80 = scmp.ne.s32.totalorder %s71, %s72
    %p81 = scmp.eq.s32.totalorder %s19, 0
    %p82 = por %p80, %p81
    %p83 = scmp.ne.s32.totalorder %s71, %s72
    %p84 = scmp.eq.s32.totalorder %s20, 1
    %p85 = por %p83, %p84
    %p87 = scmp.ne.s32.totalorder %s72, %s86
    %p88 = scmp.eq.s32.totalorder %s20, 0
    %p89 = por %p87, %p88
    %s91 = sadd.s32 %s90, 1
    %p94 = scmp.eq.s32.totalorder %s14, 1
    %p95 = scmp.ne.s32.totalorder %s90, %s92
    %p96 = scmp.eq.s32.totalorder %s14, 0
    %p97 = por %p95, %p96
    %p98 = scmp.ne.s32.totalorder %s90, %s92
    %p99 = scmp.eq.s32.totalorder %s19, 1
    %p100 = por %p98, %p99
    %p101 = scmp.ne.s32.totalorder %s92, %s93
    %p102 = scmp.eq.s32.totalorder %s19, 0
    %p103 = por %p101, %p102
    %p104 = scmp.ne.s32.totalorder %s92, %s93
    %p105 = scmp.eq.s32.totalorder %s20, 1
    %p106 = por %p104, %p105
    %p108 = scmp.ne.s32.totalorder %s93, %s107
    %p109 = scmp.eq.s32.totalorder %s20, 0
    %p110 = por %p108, %p109
    %s112 = sadd.s32 %s111, 1
    %p115 = scmp.eq.s32.totalorder %s14, 1
    %p116 = scmp.ne.s32.totalorder %s111, %s113
    %p117 = scmp.eq.s32.totalorder %s14, 0
    %p118 = por %p116, %p117
    %p119 = scmp.ne.s32.totalorder %s111, %s113
    %p120 = scmp.eq.s32.totalorder %s19, 1
    %p121 = por %p119, %p120
    %p122 = scmp.ne.s32.totalorder %s113, %s114
    %p123 = scmp.eq.s32.totalorder %s19, 0
    %p124 = por %p122, %p123
    %p125 = scmp.ne.s32.totalorder %s113, %s114
    %p126 = scmp.eq.s32.totalorder %s20, 1
    %p127 = por %p125, %p126
    %p129 = scmp.ne.s32.totalorder %s114, %s128
    %p130 = scmp.eq.s32.totalorder %s20, 0
    %p131 = por %p129, %p130
    %s133 = sadd.s32 %s132, 1
    %p136 = scmp.eq.s32.totalorder %s14, 1
    %p137 = scmp.ne.s32.totalorder %s132, %s134
    %p138 = scmp.eq.s32.totalorder %s14, 0
    %p139 = por %p137, %p138
    %p140 = scmp.ne.s32.totalorder %s132, %s134
    %p141 = scmp.eq.s32.totalorder %s19, 1
    %p142 = por %p140, %p141
    %p143 = scmp.ne.s32.totalorder %s134, %s135
    %p144 = scmp.eq.s32.totalorder %s19, 0
    %p145 = por %p143, %p144
    %p146 = scmp.ne.s32.totalorder %s134, %s135
    %p147 = scmp.eq.s32.totalorder %s20, 1
    %p148 = por %p146, %p147
    %p150 = scmp.ne.s32.totalorder %s135, %s149
    %p151 = scmp.eq.s32.totalorder %s20, 0
    %p152 = por %p150, %p151
    %s154 = sadd.s32 %s153, 1
    %p157 = scmp.eq.s32.totalorder %s14, 1
    %p158 = scmp.ne.s32.totalorder %s153, %s155
    %p159 = scmp.eq.s32.totalorder %s14, 0
    %p160 = por %p158, %p159
    %p161 = scmp.ne.s32.totalorder %s153, %s155
    %p162 = scmp.eq.s32.totalorder %s19, 1
    %p163 = por %p161, %p162
    %p164 = scmp.ne.s32.totalorder %s155, %s156
    %p165 = scmp.eq.s32.totalorder %s19, 0
    %p166 = por %p164, %p165
    %p167 = scmp.ne.s32.totalorder %s155, %s156
    %p168 = scmp.eq.s32.totalorder %s20, 1
    %p169 = por %p167, %p168
    %p171 = scmp.ne.s32.totalorder %s156, %s170
    %p172 = scmp.eq.s32.totalorder %s20, 0
    %p173 = por %p171, %p172
    %s175 = sadd.s32 %s174, 1
    %p178 = scmp.eq.s32.totalorder %s14, 1
    %p179 = scmp.ne.s32.totalorder %s174, %s176
    %p180 = scmp.eq.s32.totalorder %s14, 0
    %p181 = por %p179, %p180
    %p182 = scmp.ne.s32.totalorder %s174, %s176
    %p183 = scmp.eq.s32.totalorder %s19, 1
    %p184 = por %p182, %p183
    %p185 = scmp.ne.s32.totalorder %s176, %s177
    %p186 = scmp.eq.s32.totalorder %s19, 0
    %p187 = por %p185, %p186
    %p188 = scmp.ne.s32.totalorder %s176, %s177
    %p189 = scmp.eq.s32.totalorder %s20, 1
    %p190 = por %p188, %p189
    %p192 = scmp.ne.s32.totalorder %s177, %s191
    %p193 = scmp.eq.s32.totalorder %s20, 0
    %p194 = por %p192, %p193
    %s195 = ssub.s32 %s14, %s21
    %p196 = scmp.eq.s32.totalorder %s195, 0
    %s198 = sadd.s32 %s197, 1
    %s199 = scalar_select %p196, %s197, %s198
    %p202 = pneg %p196
    %p203 = scmp.eq.s32.totalorder %s14, 1
    %p204 = por %p202, %p203
    %p205 = scmp.ne.s32.totalorder %s197, %s200
    %p206 = scmp.eq.s32.totalorder %s14, 0
    %p207 = por %p205, %p206
    %p208 = scmp.ne.s32.totalorder %s197, %s200
    %p209 = scmp.eq.s32.totalorder %s19, 1
    %p210 = por %p208, %p209
    %p211 = scmp.ne.s32.totalorder %s200, %s201
    %p212 = scmp.eq.s32.totalorder %s19, 0
    %p213 = por %p211, %p212
    %p214 = scmp.ne.s32.totalorder %s200, %s201
    %p215 = scmp.eq.s32.totalorder %s20, 1
    %p216 = por %p214, %p215
    %p218 = scmp.ne.s32.totalorder %s201, %s217
    %p219 = scmp.eq.s32.totalorder %s20, 0
    %p220 = por %p218, %p219
    %p221 = scmp.le.s32.totalorder 1, %s14
    %p222 = scmp.lt.s32.totalorder %s14, 3
    %p223 = pnand %p221, %p222
    %p224 = pneg %p223
    // Predicated region
    $region9: #{up_block_forward.1} parent=5 // pred_check
      _
    $region10: #{up_block_forward.1} parent=5 // pred_check_branch
      %226 = sbr.rel (%p223) target = $region12
    $region11: #{up_block_forward.1} parent=5 // pred_region
      %s227 = ssub.s32 %s14, 1
      // Predicated region
      $region13: #{up_block_forward.1} parent=11 // pred_check
        %p228 = pneg %p61
      $region14: #{up_block_forward.1} parent=11 // pred_check_branch
        %230 = sbr.rel (%p228) target = $region16
      $region15: #{up_block_forward.1} parent=11 // pred_region
        _
      $region16: #{up_block_forward.1} parent=11 // pred_fallthru
        _
      // Predicated region
      $region17: #{up_block_forward.1} parent=11 // pred_check
        %p231 = pneg %p82
      $region18: #{up_block_forward.1} parent=11 // pred_check_branch
        %233 = sbr.rel (%p231) target = $region20
      $region19: #{up_block_forward.1} parent=11 // pred_region
        _
      $region20: #{up_block_forward.1} parent=11 // pred_fallthru
        _
      // Predicated region
      $region21: #{up_block_forward.1} parent=11 // pred_check
        %p234 = pneg %p103
      $region22: #{up_block_forward.1} parent=11 // pred_check_branch
        %236 = sbr.rel (%p234) target = $region24
      $region23: #{up_block_forward.1} parent=11 // pred_region
        _
      $region24: #{up_block_forward.1} parent=11 // pred_fallthru
        _
      // Predicated region
      $region25: #{up_block_forward.1} parent=11 // pred_check
        %p237 = pneg %p124
      $region26: #{up_block_forward.1} parent=11 // pred_check_branch
        %239 = sbr.rel (%p237) target = $region28
      $region27: #{up_block_forward.1} parent=11 // pred_region
        _
      $region28: #{up_block_forward.1} parent=11 // pred_fallthru
        _
      // Predicated region
      $region29: #{up_block_forward.1} parent=11 // pred_check
        %p240 = pneg %p145
      $region30: #{up_block_forward.1} parent=11 // pred_check_branch
        %242 = sbr.rel (%p240) target = $region32
      $region31: #{up_block_forward.1} parent=11 // pred_region
        _
      $region32: #{up_block_forward.1} parent=11 // pred_fallthru
        _
      // Predicated region
      $region33: #{up_block_forward.1} parent=11 // pred_check
        %p243 = pneg %p166
      $region34: #{up_block_forward.1} parent=11 // pred_check_branch
        %245 = sbr.rel (%p243) target = $region36
      $region35: #{up_block_forward.1} parent=11 // pred_region
        _
      $region36: #{up_block_forward.1} parent=11 // pred_fallthru
        _
      // Predicated region
      $region37: #{up_block_forward.1} parent=11 // pred_check
        %p246 = pneg %p187
      $region38: #{up_block_forward.1} parent=11 // pred_check_branch
        %248 = sbr.rel (%p246) target = $region40
      $region39: #{up_block_forward.1} parent=11 // pred_region
        _
      $region40: #{up_block_forward.1} parent=11 // pred_fallthru
        _
    $region12: #{up_block_forward.1} parent=5 // pred_fallthru
      _
    %p249 = scmp.lt.s32.totalorder %s14, 2
    // Predicated region
    $region41: #{up_block_forward.1} parent=5 // pred_check
      %p250 = pneg %p249
    $region42: #{up_block_forward.1} parent=5 // pred_check_branch
      %252 = sbr.rel (%p250) target = $region44
    $region43: #{up_block_forward.1} parent=5 // pred_region
      // Predicated region
      $region45: #{up_block_forward.1} parent=43 // pred_check
        %p253 = pneg %p34
      $region46: #{up_block_forward.1} parent=43 // pred_check_branch
        %255 = sbr.rel (%p253) target = $region48
      $region47: #{up_block_forward.1} parent=43 // pred_region
        %p256 = scmp.lt.s32.totalorder %s14, 1
        %s257 = scalar_select %p256, %s14, 1
        %s258 = smul.addr %s257, 3
        %s259 = smul.addr %s258, 4
        %s260 = scalar_lea.vmem %s0, %s259
      $region48: #{up_block_forward.1} parent=43 // pred_fallthru
        _
    $region44: #{up_block_forward.1} parent=5 // pred_fallthru
      _
    %p261 = scmp.le.s32.totalorder 1, %s14
    %p262 = scmp.lt.s32.totalorder %s14, 3
    %p263 = pnand %p261, %p262
    %p264 = pneg %p263
    // Predicated region
    $region49: #{up_block_forward.1} parent=5 // pred_check
      _
    $region50: #{up_block_forward.1} parent=5 // pred_check_branch
      %266 = sbr.rel (%p263) target = $region52
    $region51: #{up_block_forward.1} parent=5 // pred_region
      %s267 = ssub.s32 %s14, 1
      %p268 = scmp.lt.s32.totalorder %s19, 1
      %s269 = scalar_select %p268, %s19, 1
      %s270 = smul.addr %s269, 3
      %s271 = smul.addr %s270, 4
      %s272 = scalar_lea.vmem %s0, %s271
      %p273 = pneg %p40
      %p274 = pneg %p37
      %p275 = pneg %p61
      %p276 = pneg %p58
      %p277 = pneg %p82
      %p278 = pneg %p79
      %p279 = pneg %p103
      %p280 = pneg %p100
      %p281 = pneg %p124
      %p282 = pneg %p121
      %p283 = pneg %p145
      %p284 = pneg %p142
      %p285 = pneg %p166
      %p286 = pneg %p163
      %p287 = pneg %p187
      %p288 = pneg %p184
      %p289 = pneg %p213
      %p290 = pneg %p210
      %p291 = scmp.lt.s32.totalorder %s19, 1
      %s292 = scalar_select %p291, %s19, 1
      %s293 = smul.addr %s292, 6
      %s294 = smul.addr %s293, 8
      %s295 = scalar_lea.vmem %s8, %s294
      %p296 = scmp.lt.s32.totalorder %s19, 1
      %s297 = scalar_select %p296, %s19, 1
      %s298 = smul.addr %s297, 3
      %s299 = smul.addr %s298, 4
      %s300 = scalar_lea.vmem %s0, %s299
      %p301 = scmp.lt.s32.totalorder %s19, 1
      %s302 = scalar_select %p301, %s19, 1
      %s303 = smul.addr %s302, 6
      %s304 = smul.addr %s303, 8
      %s305 = scalar_lea.vmem %s8, %s304
      %v307 = vld [vmem:[%s1] sm:$0x7]
      %vm308 = vcmask 322560
      %309 = vst.msk [vmem:[#allocation2] sm:$0xf] %vm308, 0
      %vm310 = vcmask 1044288
      %vm311 = vcmask 130052
      %vm312 = vmor %vm311, %vm310
      %313 = vst.msk [vmem:[#allocation2 + $0x8] sm:$0xff] %vm312, 0
      %vm314 = vcmask 320512
      %315 = vst.msk [vmem:[#allocation3] sm:$0x3] %vm314, 0
      %vm316 = vcmask 1042240
      %vm317 = vcmask 125954
      %vm318 = vmor %vm317, %vm316
      %319 = vst.msk [vmem:[#allocation3 + $0x4] sm:$0xf] %vm318, 0
      %v320 = vld [vmem:[%s2] sm:$0xf]
      %v321 = vld [vmem:[%s300] sm:$0xff]
      %v322 = vld [vmem:[%s300 + $0x8] sm:$0xf]
      %v323 = vld [vmem:[%s3] sm:$0xff]
      %325 = vset.pattern.permute.xlu0 0
      %326 = vperm.xlu0 %325, %v323
      %v327 = vpop.permute.xlu0 %326
      %v331 = vunpack.c.l.b16 %v321
      %v332 = vunpack.c.h.b16 %v321
      %v333 = vunpack.c.l.b16 %v322
      %v334 = vpack.c.b16 %v331, %v331
      %v335 = vpack.c.b16 %v332, %v332
      %v336 = vpack.c.b16 %v333, %v333
      %vm337 = vcmask 64512
      %v339 = vsel %vm337, %v320, 0
      %vm341 = vcmask 1043456
      %v343 = vsel %vm341, %v334, 0
      %v346 = vsel %vm341, %v335, 0
      %v349 = vsel %vm341, %v336, 0
      %351 = vmatprep.subr.bf16.mxu0 0
      %352 = vmatpush1.bf16.msra.mxu0 0
      %353 = vmatprep.subr.bf16.mxu0 0
      %354 = vmatpush1.bf16.msra.mxu0 0
      %355 = vmatprep.subr.bf16.mxu0 0
      %356 = vmatpush1.bf16.msra.mxu0 0
      %357 = vmatprep.subr.bf16.mxu0 0
      %358 = vmatpush1.bf16.msra.mxu0 0
      %359 = vmatprep.subr.bf16.mxu0 0
      %360 = vmatpush1.bf16.msra.mxu0 0
      %361 = vmatprep.subr.bf16.mxu0 0
      %362 = vmatpush1.bf16.msra.mxu0 0
      %363 = vmatprep.subr.bf16.mxu0 0
      %364 = vmatpush1.bf16.msra.mxu0 0
      %365 = vmatprep.subr.bf16.mxu0 %v346
      %366 = vmatpush1.bf16.msra.mxu0 %v343
      %367 = vmatprep.subr.bf16.mxu0 0
      %368 = vmatpush2.bf16.msra.mxu0 0
      %369 = vmatprep.subr.bf16.mxu0 0
      %370 = vmatpush2.bf16.msra.mxu0 0
      %371 = vmatprep.subr.bf16.mxu0 0
      %372 = vmatpush2.bf16.msra.mxu0 0
      %373 = vmatprep.subr.bf16.mxu0 0
      %374 = vmatpush2.bf16.msra.mxu0 0
      %375 = vmatprep.subr.bf16.mxu0 0
      %376 = vmatpush2.bf16.msra.mxu0 0
      %377 = vmatprep.subr.bf16.mxu0 0
      %378 = vmatpush2.bf16.msra.mxu0 0
      %379 = vmatprep.subr.bf16.mxu0 0
      %380 = vmatpush2.bf16.msra.mxu0 0
      %381 = vmatprep.subr.bf16.mxu0 0
      %382 = vmatpush2.bf16.msra.mxu0 0
      %383 = vmatprep.mubr.bf16.mxu0 0
      %384 = vmatmul.mubr.bf16.gmra.mxu0 %v339
      %v385 = vpop.f32.mrf.mxu0
      %v386 = vadd.f32 %v327, %v385
      %v387 = vpop.f32.mrf.mxu0
      %v388 = vadd.f32 %v327, %v387
      %v389 = vpop.f32.mrf.mxu0
      %v390 = vpop.f32.mrf.mxu0
      %391 = vdwg.mxu0
      %392 = vmatprep.subr.bf16.mxu0 0
      %393 = vmatpush1.bf16.msra.mxu0 0
      %394 = vmatprep.subr.bf16.mxu0 0
      %395 = vmatpush1.bf16.msra.mxu0 0
      %396 = vmatprep.subr.bf16.mxu0 0
      %397 = vmatpush1.bf16.msra.mxu0 0
      %398 = vmatprep.subr.bf16.mxu0 0
      %399 = vmatpush1.bf16.msra.mxu0 0
      %400 = vmatprep.subr.bf16.mxu0 0
      %401 = vmatpush1.bf16.msra.mxu0 0
      %402 = vmatprep.subr.bf16.mxu0 0
      %403 = vmatpush1.bf16.msra.mxu0 0
      %404 = vmatprep.subr.bf16.mxu0 0
      %405 = vmatpush1.bf16.msra.mxu0 0
      %406 = vmatprep.subr.bf16.mxu0 0
      %407 = vmatpush1.bf16.msra.mxu0 %v349
      %408 = vmatprep.subr.bf16.mxu0 0
      %409 = vmatpush2.bf16.msra.mxu0 0
      %410 = vmatprep.subr.bf16.mxu0 0
      %411 = vmatpush2.bf16.msra.mxu0 0
      %412 = vmatprep.subr.bf16.mxu0 0
      %413 = vmatpush2.bf16.msra.mxu0 0
      %414 = vmatprep.subr.bf16.mxu0 0
      %415 = vmatpush2.bf16.msra.mxu0 0
      %416 = vmatprep.subr.bf16.mxu0 0
      %417 = vmatpush2.bf16.msra.mxu0 0
      %418 = vmatprep.subr.bf16.mxu0 0
      %419 = vmatpush2.bf16.msra.mxu0 0
      %420 = vmatprep.subr.bf16.mxu0 0
      %421 = vmatpush2.bf16.msra.mxu0 0
      %422 = vmatprep.subr.bf16.mxu0 0
      %423 = vmatpush2.bf16.msra.mxu0 0
      %424 = vmatprep.mubr.bf16.mxu0 0
      %425 = vmatmul.mubr.bf16.gmra.mxu0 %v339
      %v426 = vpop.f32.mrf.mxu0
      %v427 = vadd.f32 %v327, %v426
      %v428 = vpop.f32.mrf.mxu0
      %v429 = vpop.f32.mrf.mxu0
      %v430 = vpop.f32.mrf.mxu0
      %431 = vdwg.mxu0
      %v432 = vmax.f32 %v386, 0.0
      %v433 = vmax.f32 %v388, 0.0
      %v434 = vmax.f32 %v427, 0.0
      %v436 = vlaneseq
      %v437 = vshrl.u32 %v436, 7
      %v438 = vsub.s32 0, %v437
      %v439 = vrot.slane %v307, %v438
      %v440 = vlaneseq
      %v441 = vshrl.u32 %v440, 7
      %v442 = vsub.s32 1, %v441
      %v443 = vrot.slane %v307, %v442
      %v444 = vlaneseq
      %v445 = vshrl.u32 %v444, 7
      %v446 = vsub.s32 2, %v445
      %v447 = vrot.slane %v307, %v446
      %v451 = vmul.f32 %v432, %v439
      %v452 = vmul.f32 %v433, %v443
      %v453 = vmul.f32 %v434, %v447
      %v454 = vpack.c.bf16 %v451, %v451
      %v455 = vpack.c.bf16 %v452, %v452
      %v456 = vpack.c.bf16 %v453, %v453
      %v460 = vunpack.c.l.b16 %v454
      %v461 = vunpack.c.l.b16 %v455
      %v462 = vunpack.c.l.b16 %v456
      %v463 = vpack.c.b16 %v461, %v460
      %v464 = vpack.c.b16 %v462, %v462
      %465 = vrot.lane.b32.xlu0 %v463, 40
      %v466 = vpop.permute.xlu0 %465
      %467 = vrot.lane.b32.xlu0 %v464, 40
      %v468 = vpop.permute.xlu0 %467
      %v469 = vrot.slane %v466, 4
      %vm470 = vcmask 326656
      %v471 = vsel %vm470, %v469, %v466
      %v472 = vsel %vm470, %v469, %v468
      %vm475 = vcmask 1043776
      %vm476 = vcmask 1047556
      %vm477 = vmor %vm476, %vm475
      %478 = vst.msk [vmem:[#allocation2] sm:$0xff] %vm477, %v471
      %vm479 = vcmask 846848
      %480 = vst.msk [vmem:[#allocation2 + $0x8] sm:$0xf] %vm479, %v472
      %v481 = vld [vmem:[%s4] sm:$0x3]
      %v482 = vld [vmem:[#allocation2] sm:$0xff]
      %v483 = vld [vmem:[#allocation2 + $0x8] sm:$0xf]
      %s484 = scalar_lea.vmem %s4, 2
      %v485 = vld [vmem:[%s484] sm:$0x3]
      %v488 = vunpack.c.l.b16 %v482
      %v489 = vunpack.c.h.b16 %v482
      %v490 = vunpack.c.l.b16 %v483
      %v491 = vpack.c.b16 %v488, %v488
      %v492 = vpack.c.b16 %v489, %v489
      %v493 = vpack.c.b16 %v490, %v490
      %494 = vrot.lane.b32.xlu0 %v491, 108
      %v495 = vpop.permute.xlu0 %494
      %496 = vrot.lane.b32.xlu0 %v492, 108
      %v497 = vpop.permute.xlu0 %496
      %498 = vrot.lane.b32.xlu0 %v493, 108
      %v499 = vpop.permute.xlu0 %498
      %vm500 = vcmask 883712
      %v501 = vsel %vm500, %v495, %v497
      %v502 = vsel %vm500, %v497, %v499
      %v504 = vsel %vm337, %v485, 0
      %v507 = vsel %vm341, %v501, 0
      %v510 = vsel %vm341, %v502, 0
      %v513 = vsel %vm341, %v499, 0
      %515 = vmatprep.subr.bf16.mxu0 0
      %516 = vmatpush1.bf16.msra.mxu0 0
      %517 = vmatprep.subr.bf16.mxu0 0
      %518 = vmatpush1.bf16.msra.mxu0 0
      %519 = vmatprep.subr.bf16.mxu0 0
      %520 = vmatpush1.bf16.msra.mxu0 0
      %521 = vmatprep.subr.bf16.mxu0 0
      %522 = vmatpush1.bf16.msra.mxu0 0
      %523 = vmatprep.subr.bf16.mxu0 0
      %524 = vmatpush1.bf16.msra.mxu0 0
      %525 = vmatprep.subr.bf16.mxu0 0
      %526 = vmatpush1.bf16.msra.mxu0 0
      %527 = vmatprep.subr.bf16.mxu0 0
      %528 = vmatpush1.bf16.msra.mxu0 0
      %529 = vmatprep.subr.bf16.mxu0 %v510
      %530 = vmatpush1.bf16.msra.mxu0 %v507
      %531 = vmatprep.subr.bf16.mxu0 0
      %532 = vmatpush2.bf16.msra.mxu0 0
      %533 = vmatprep.subr.bf16.mxu0 0
      %534 = vmatpush2.bf16.msra.mxu0 0
      %535 = vmatprep.subr.bf16.mxu0 0
      %536 = vmatpush2.bf16.msra.mxu0 0
      %537 = vmatprep.subr.bf16.mxu0 0
      %538 = vmatpush2.bf16.msra.mxu0 0
      %539 = vmatprep.subr.bf16.mxu0 0
      %540 = vmatpush2.bf16.msra.mxu0 0
      %541 = vmatprep.subr.bf16.mxu0 0
      %542 = vmatpush2.bf16.msra.mxu0 0
      %543 = vmatprep.subr.bf16.mxu0 0
      %544 = vmatpush2.bf16.msra.mxu0 0
      %545 = vmatprep.subr.bf16.mxu0 0
      %546 = vmatpush2.bf16.msra.mxu0 0
      %547 = vmatprep.mubr.bf16.mxu0 0
      %548 = vmatmul.mubr.bf16.gmra.mxu0 %v504
      %v549 = vpop.f32.mrf.mxu0
      %v550 = vadd.f32 0.0, %v549
      %v551 = vpop.f32.mrf.mxu0
      %v552 = vadd.f32 0.0, %v551
      %v553 = vpop.f32.mrf.mxu0
      %v554 = vpop.f32.mrf.mxu0
      %555 = vdwg.mxu0
      %556 = vmatprep.subr.bf16.mxu0 0
      %557 = vmatpush1.bf16.msra.mxu0 0
      %558 = vmatprep.subr.bf16.mxu0 0
      %559 = vmatpush1.bf16.msra.mxu0 0
      %560 = vmatprep.subr.bf16.mxu0 0
      %561 = vmatpush1.bf16.msra.mxu0 0
      %562 = vmatprep.subr.bf16.mxu0 0
      %563 = vmatpush1.bf16.msra.mxu0 0
      %564 = vmatprep.subr.bf16.mxu0 0
      %565 = vmatpush1.bf16.msra.mxu0 0
      %566 = vmatprep.subr.bf16.mxu0 0
      %567 = vmatpush1.bf16.msra.mxu0 0
      %568 = vmatprep.subr.bf16.mxu0 0
      %569 = vmatpush1.bf16.msra.mxu0 0
      %570 = vmatprep.subr.bf16.mxu0 0
      %571 = vmatpush1.bf16.msra.mxu0 %v513
      %572 = vmatprep.subr.bf16.mxu0 0
      %573 = vmatpush2.bf16.msra.mxu0 0
      %574 = vmatprep.subr.bf16.mxu0 0
      %575 = vmatpush2.bf16.msra.mxu0 0
      %576 = vmatprep.subr.bf16.mxu0 0
      %577 = vmatpush2.bf16.msra.mxu0 0
      %578 = vmatprep.subr.bf16.mxu0 0
      %579 = vmatpush2.bf16.msra.mxu0 0
      %580 = vmatprep.subr.bf16.mxu0 0
      %581 = vmatpush2.bf16.msra.mxu0 0
      %582 = vmatprep.subr.bf16.mxu0 0
      %583 = vmatpush2.bf16.msra.mxu0 0
      %584 = vmatprep.subr.bf16.mxu0 0
      %585 = vmatpush2.bf16.msra.mxu0 0
      %586 = vmatprep.subr.bf16.mxu0 0
      %587 = vmatpush2.bf16.msra.mxu0 0
      %588 = vmatprep.mubr.bf16.mxu0 0
      %589 = vmatmul.mubr.bf16.gmra.mxu0 %v504
      %v590 = vpop.f32.mrf.mxu0
      %v591 = vadd.f32 0.0, %v590
      %v592 = vpop.f32.mrf.mxu0
      %v593 = vpop.f32.mrf.mxu0
      %v594 = vpop.f32.mrf.mxu0
      %595 = vdwg.mxu0
      %596 = vrot.lane.b32.xlu0 %v491, 109
      %v597 = vpop.permute.xlu0 %596
      %598 = vrot.lane.b32.xlu0 %v492, 109
      %v599 = vpop.permute.xlu0 %598
      %600 = vrot.lane.b32.xlu0 %v493, 109
      %v601 = vpop.permute.xlu0 %600
      %vm602 = vcmask 891904
      %v603 = vsel %vm602, %v597, %v599
      %v604 = vsel %vm602, %v599, %v601
      %v606 = vsel %vm337, %v481, 0
      %v609 = vsel %vm341, %v603, 0
      %v612 = vsel %vm341, %v604, 0
      %v615 = vsel %vm341, %v601, 0
      %617 = vmatprep.subr.bf16.mxu0 0
      %618 = vmatpush1.bf16.msra.mxu0 0
      %619 = vmatprep.subr.bf16.mxu0 0
      %620 = vmatpush1.bf16.msra.mxu0 0
      %621 = vmatprep.subr.bf16.mxu0 0
      %622 = vmatpush1.bf16.msra.mxu0 0
      %623 = vmatprep.subr.bf16.mxu0 0
      %624 = vmatpush1.bf16.msra.mxu0 0
      %625 = vmatprep.subr.bf16.mxu0 0
      %626 = vmatpush1.bf16.msra.mxu0 0
      %627 = vmatprep.subr.bf16.mxu0 0
      %628 = vmatpush1.bf16.msra.mxu0 0
      %629 = vmatprep.subr.bf16.mxu0 0
      %630 = vmatpush1.bf16.msra.mxu0 0
      %631 = vmatprep.subr.bf16.mxu0 %v612
      %632 = vmatpush1.bf16.msra.mxu0 %v609
      %633 = vmatprep.subr.bf16.mxu0 0
      %634 = vmatpush2.bf16.msra.mxu0 0
      %635 = vmatprep.subr.bf16.mxu0 0
      %636 = vmatpush2.bf16.msra.mxu0 0
      %637 = vmatprep.subr.bf16.mxu0 0
      %638 = vmatpush2.bf16.msra.mxu0 0
      %639 = vmatprep.subr.bf16.mxu0 0
      %640 = vmatpush2.bf16.msra.mxu0 0
      %641 = vmatprep.subr.bf16.mxu0 0
      %642 = vmatpush2.bf16.msra.mxu0 0
      %643 = vmatprep.subr.bf16.mxu0 0
      %644 = vmatpush2.bf16.msra.mxu0 0
      %645 = vmatprep.subr.bf16.mxu0 0
      %646 = vmatpush2.bf16.msra.mxu0 0
      %647 = vmatprep.subr.bf16.mxu0 0
      %648 = vmatpush2.bf16.msra.mxu0 0
      %649 = vmatprep.mubr.bf16.mxu0 0
      %650 = vmatmul.mubr.bf16.gmra.mxu0 %v606
      %v651 = vpop.f32.mrf.mxu0
      %v652 = vadd.f32 %v550, %v651
      %v653 = vpop.f32.mrf.mxu0
      %v654 = vadd.f32 %v552, %v653
      %v655 = vpop.f32.mrf.mxu0
      %v656 = vpop.f32.mrf.mxu0
      %657 = vdwg.mxu0
      %658 = vmatprep.subr.bf16.mxu0 0
      %659 = vmatpush1.bf16.msra.mxu0 0
      %660 = vmatprep.subr.bf16.mxu0 0
      %661 = vmatpush1.bf16.msra.mxu0 0
      %662 = vmatprep.subr.bf16.mxu0 0
      %663 = vmatpush1.bf16.msra.mxu0 0
      %664 = vmatprep.subr.bf16.mxu0 0
      %665 = vmatpush1.bf16.msra.mxu0 0
      %666 = vmatprep.subr.bf16.mxu0 0
      %667 = vmatpush1.bf16.msra.mxu0 0
      %668 = vmatprep.subr.bf16.mxu0 0
      %669 = vmatpush1.bf16.msra.mxu0 0
      %670 = vmatprep.subr.bf16.mxu0 0
      %671 = vmatpush1.bf16.msra.mxu0 0
      %672 = vmatprep.subr.bf16.mxu0 0
      %673 = vmatpush1.bf16.msra.mxu0 %v615
      %674 = vmatprep.subr.bf16.mxu0 0
      %675 = vmatpush2.bf16.msra.mxu0 0
      %676 = vmatprep.subr.bf16.mxu0 0
      %677 = vmatpush2.bf16.msra.mxu0 0
      %678 = vmatprep.subr.bf16.mxu0 0
      %679 = vmatpush2.bf16.msra.mxu0 0
      %680 = vmatprep.subr.bf16.mxu0 0
      %681 = vmatpush2.bf16.msra.mxu0 0
      %682 = vmatprep.subr.bf16.mxu0 0
      %683 = vmatpush2.bf16.msra.mxu0 0
      %684 = vmatprep.subr.bf16.mxu0 0
      %685 = vmatpush2.bf16.msra.mxu0 0
      %686 = vmatprep.subr.bf16.mxu0 0
      %687 = vmatpush2.bf16.msra.mxu0 0
      %688 = vmatprep.subr.bf16.mxu0 0
      %689 = vmatpush2.bf16.msra.mxu0 0
      %690 = vmatprep.mubr.bf16.mxu0 0
      %691 = vmatmul.mubr.bf16.gmra.mxu0 %v606
      %v692 = vpop.f32.mrf.mxu0
      %v693 = vadd.f32 %v591, %v692
      %v694 = vpop.f32.mrf.mxu0
      %v695 = vpop.f32.mrf.mxu0
      %v696 = vpop.f32.mrf.mxu0
      %697 = vdwg.mxu0
      %s698 = scalar_lea.vmem %s4, 4
      %v699 = vld [vmem:[%s698] sm:$0x3]
      %700 = vrot.lane.b32.xlu0 %v491, 107
      %v701 = vpop.permute.xlu0 %700
      %702 = vrot.lane.b32.xlu0 %v492, 107
      %v703 = vpop.permute.xlu0 %702
      %704 = vrot.lane.b32.xlu0 %v493, 107
      %v705 = vpop.permute.xlu0 %704
      %vm706 = vcmask 875520
      %v707 = vsel %vm706, %v701, %v703
      %v708 = vsel %vm706, %v703, %v705
      %v710 = vsel %vm337, %v699, 0
      %v713 = vsel %vm341, %v707, 0
      %v716 = vsel %vm341, %v708, 0
      %v719 = vsel %vm341, %v705, 0
      %721 = vmatprep.subr.bf16.mxu0 0
      %722 = vmatpush1.bf16.msra.mxu0 0
      %723 = vmatprep.subr.bf16.mxu0 0
      %724 = vmatpush1.bf16.msra.mxu0 0
      %725 = vmatprep.subr.bf16.mxu0 0
      %726 = vmatpush1.bf16.msra.mxu0 0
      %727 = vmatprep.subr.bf16.mxu0 0
      %728 = vmatpush1.bf16.msra.mxu0 0
      %729 = vmatprep.subr.bf16.mxu0 0
      %730 = vmatpush1.bf16.msra.mxu0 0
      %731 = vmatprep.subr.bf16.mxu0 0
      %732 = vmatpush1.bf16.msra.mxu0 0
      %733 = vmatprep.subr.bf16.mxu0 0
      %734 = vmatpush1.bf16.msra.mxu0 0
      %735 = vmatprep.subr.bf16.mxu0 %v716
      %736 = vmatpush1.bf16.msra.mxu0 %v713
      %737 = vmatprep.subr.bf16.mxu0 0
      %738 = vmatpush2.bf16.msra.mxu0 0
      %739 = vmatprep.subr.bf16.mxu0 0
      %740 = vmatpush2.bf16.msra.mxu0 0
      %741 = vmatprep.subr.bf16.mxu0 0
      %742 = vmatpush2.bf16.msra.mxu0 0
      %743 = vmatprep.subr.bf16.mxu0 0
      %744 = vmatpush2.bf16.msra.mxu0 0
      %745 = vmatprep.subr.bf16.mxu0 0
      %746 = vmatpush2.bf16.msra.mxu0 0
      %747 = vmatprep.subr.bf16.mxu0 0
      %748 = vmatpush2.bf16.msra.mxu0 0
      %749 = vmatprep.subr.bf16.mxu0 0
      %750 = vmatpush2.bf16.msra.mxu0 0
      %751 = vmatprep.subr.bf16.mxu0 0
      %752 = vmatpush2.bf16.msra.mxu0 0
      %753 = vmatprep.mubr.bf16.mxu0 0
      %754 = vmatmul.mubr.bf16.gmra.mxu0 %v710
      %v755 = vpop.f32.mrf.mxu0
      %v756 = vadd.f32 0.0, %v755
      %v757 = vpop.f32.mrf.mxu0
      %v758 = vadd.f32 0.0, %v757
      %v759 = vpop.f32.mrf.mxu0
      %v760 = vpop.f32.mrf.mxu0
      %761 = vdwg.mxu0
      %762 = vmatprep.subr.bf16.mxu0 0
      %763 = vmatpush1.bf16.msra.mxu0 0
      %764 = vmatprep.subr.bf16.mxu0 0
      %765 = vmatpush1.bf16.msra.mxu0 0
      %766 = vmatprep.subr.bf16.mxu0 0
      %767 = vmatpush1.bf16.msra.mxu0 0
      %768 = vmatprep.subr.bf16.mxu0 0
      %769 = vmatpush1.bf16.msra.mxu0 0
      %770 = vmatprep.subr.bf16.mxu0 0
      %771 = vmatpush1.bf16.msra.mxu0 0
      %772 = vmatprep.subr.bf16.mxu0 0
      %773 = vmatpush1.bf16.msra.mxu0 0
      %774 = vmatprep.subr.bf16.mxu0 0
      %775 = vmatpush1.bf16.msra.mxu0 0
      %776 = vmatprep.subr.bf16.mxu0 0
      %777 = vmatpush1.bf16.msra.mxu0 %v719
      %778 = vmatprep.subr.bf16.mxu0 0
      %779 = vmatpush2.bf16.msra.mxu0 0
      %780 = vmatprep.subr.bf16.mxu0 0
      %781 = vmatpush2.bf16.msra.mxu0 0
      %782 = vmatprep.subr.bf16.mxu0 0
      %783 = vmatpush2.bf16.msra.mxu0 0
      %784 = vmatprep.subr.bf16.mxu0 0
      %785 = vmatpush2.bf16.msra.mxu0 0
      %786 = vmatprep.subr.bf16.mxu0 0
      %787 = vmatpush2.bf16.msra.mxu0 0
      %788 = vmatprep.subr.bf16.mxu0 0
      %789 = vmatpush2.bf16.msra.mxu0 0
      %790 = vmatprep.subr.bf16.mxu0 0
      %791 = vmatpush2.bf16.msra.mxu0 0
      %792 = vmatprep.subr.bf16.mxu0 0
      %793 = vmatpush2.bf16.msra.mxu0 0
      %794 = vmatprep.mubr.bf16.mxu0 0
      %795 = vmatmul.mubr.bf16.gmra.mxu0 %v710
      %v796 = vpop.f32.mrf.mxu0
      %v797 = vadd.f32 0.0, %v796
      %v798 = vpop.f32.mrf.mxu0
      %v799 = vpop.f32.mrf.mxu0
      %v800 = vpop.f32.mrf.mxu0
      %801 = vdwg.mxu0
      %v802 = vadd.f32 %v652, %v756
      %v803 = vadd.f32 %v654, %v758
      %v804 = vadd.f32 %v693, %v797
      %s805 = scalar_lea.vmem %s4, 6
      %v806 = vld [vmem:[%s805] sm:$0x3]
      %807 = vrot.lane.b32.xlu0 %v491, 89
      %v808 = vpop.permute.xlu0 %807
      %809 = vrot.lane.b32.xlu0 %v492, 89
      %v810 = vpop.permute.xlu0 %809
      %811 = vrot.lane.b32.xlu0 %v493, 89
      %v812 = vpop.permute.xlu0 %811
      %vm813 = vcmask 728064
      %v814 = vsel %vm813, %v808, %v810
      %v815 = vsel %vm813, %v810, %v812
      %v817 = vsel %vm337, %v806, 0
      %v820 = vsel %vm341, %v814, 0
      %v823 = vsel %vm341, %v815, 0
      %v826 = vsel %vm341, %v812, 0
      %828 = vmatprep.subr.bf16.mxu0 0
      %829 = vmatpush1.bf16.msra.mxu0 0
      %830 = vmatprep.subr.bf16.mxu0 0
      %831 = vmatpush1.bf16.msra.mxu0 0
      %832 = vmatprep.subr.bf16.mxu0 0
      %833 = vmatpush1.bf16.msra.mxu0 0
      %834 = vmatprep.subr.bf16.mxu0 0
      %835 = vmatpush1.bf16.msra.mxu0 0
      %836 = vmatprep.subr.bf16.mxu0 0
      %837 = vmatpush1.bf16.msra.mxu0 0
      %838 = vmatprep.subr.bf16.mxu0 0
      %839 = vmatpush1.bf16.msra.mxu0 0
      %840 = vmatprep.subr.bf16.mxu0 0
      %841 = vmatpush1.bf16.msra.mxu0 0
      %842 = vmatprep.subr.bf16.mxu0 %v823
      %843 = vmatpush1.bf16.msra.mxu0 %v820
      %844 = vmatprep.subr.bf16.mxu0 0
      %845 = vmatpush2.bf16.msra.mxu0 0
      %846 = vmatprep.subr.bf16.mxu0 0
      %847 = vmatpush2.bf16.msra.mxu0 0
      %848 = vmatprep.subr.bf16.mxu0 0
      %849 = vmatpush2.bf16.msra.mxu0 0
      %850 = vmatprep.subr.bf16.mxu0 0
      %851 = vmatpush2.bf16.msra.mxu0 0
      %852 = vmatprep.subr.bf16.mxu0 0
      %853 = vmatpush2.bf16.msra.mxu0 0
      %854 = vmatprep.subr.bf16.mxu0 0
      %855 = vmatpush2.bf16.msra.mxu0 0
      %856 = vmatprep.subr.bf16.mxu0 0
      %857 = vmatpush2.bf16.msra.mxu0 0
      %858 = vmatprep.subr.bf16.mxu0 0
      %859 = vmatpush2.bf16.msra.mxu0 0
      %860 = vmatprep.mubr.bf16.mxu0 0
      %861 = vmatmul.mubr.bf16.gmra.mxu0 %v817
      %v862 = vpop.f32.mrf.mxu0
      %v863 = vadd.f32 0.0, %v862
      %v864 = vpop.f32.mrf.mxu0
      %v865 = vadd.f32 0.0, %v864
      %v866 = vpop.f32.mrf.mxu0
      %v867 = vpop.f32.mrf.mxu0
      %868 = vdwg.mxu0
      %869 = vmatprep.subr.bf16.mxu0 0
      %870 = vmatpush1.bf16.msra.mxu0 0
      %871 = vmatprep.subr.bf16.mxu0 0
      %872 = vmatpush1.bf16.msra.mxu0 0
      %873 = vmatprep.subr.bf16.mxu0 0
      %874 = vmatpush1.bf16.msra.mxu0 0
      %875 = vmatprep.subr.bf16.mxu0 0
      %876 = vmatpush1.bf16.msra.mxu0 0
      %877 = vmatprep.subr.bf16.mxu0 0
      %878 = vmatpush1.bf16.msra.mxu0 0
      %879 = vmatprep.subr.bf16.mxu0 0
      %880 = vmatpush1.bf16.msra.mxu0 0
      %881 = vmatprep.subr.bf16.mxu0 0
      %882 = vmatpush1.bf16.msra.mxu0 0
      %883 = vmatprep.subr.bf16.mxu0 0
      %884 = vmatpush1.bf16.msra.mxu0 %v826
      %885 = vmatprep.subr.bf16.mxu0 0
      %886 = vmatpush2.bf16.msra.mxu0 0
      %887 = vmatprep.subr.bf16.mxu0 0
      %888 = vmatpush2.bf16.msra.mxu0 0
      %889 = vmatprep.subr.bf16.mxu0 0
      %890 = vmatpush2.bf16.msra.mxu0 0
      %891 = vmatprep.subr.bf16.mxu0 0
      %892 = vmatpush2.bf16.msra.mxu0 0
      %893 = vmatprep.subr.bf16.mxu0 0
      %894 = vmatpush2.bf16.msra.mxu0 0
      %895 = vmatprep.subr.bf16.mxu0 0
      %896 = vmatpush2.bf16.msra.mxu0 0
      %897 = vmatprep.subr.bf16.mxu0 0
      %898 = vmatpush2.bf16.msra.mxu0 0
      %899 = vmatprep.subr.bf16.mxu0 0
      %900 = vmatpush2.bf16.msra.mxu0 0
      %901 = vmatprep.mubr.bf16.mxu0 0
      %902 = vmatmul.mubr.bf16.gmra.mxu0 %v817
      %v903 = vpop.f32.mrf.mxu0
      %v904 = vadd.f32 0.0, %v903
      %v905 = vpop.f32.mrf.mxu0
      %v906 = vpop.f32.mrf.mxu0
      %v907 = vpop.f32.mrf.mxu0
      %908 = vdwg.mxu0
      %v909 = vadd.f32 %v802, %v863
      %v910 = vadd.f32 %v803, %v865
      %v911 = vadd.f32 %v804, %v904
      %s912 = scalar_lea.vmem %s4, 8
      %v913 = vld [vmem:[%s912] sm:$0x3]
      %914 = vrot.lane.b32.xlu0 %v491, 88
      %v915 = vpop.permute.xlu0 %914
      %916 = vrot.lane.b32.xlu0 %v492, 88
      %v917 = vpop.permute.xlu0 %916
      %918 = vrot.lane.b32.xlu0 %v493, 88
      %v919 = vpop.permute.xlu0 %918
      %vm920 = vcmask 719872
      %v921 = vsel %vm920, %v915, %v917
      %v922 = vsel %vm920, %v917, %v919
      %v924 = vsel %vm337, %v913, 0
      %v927 = vsel %vm341, %v921, 0
      %v930 = vsel %vm341, %v922, 0
      %v933 = vsel %vm341, %v919, 0
      %935 = vmatprep.subr.bf16.mxu0 0
      %936 = vmatpush1.bf16.msra.mxu0 0
      %937 = vmatprep.subr.bf16.mxu0 0
      %938 = vmatpush1.bf16.msra.mxu0 0
      %939 = vmatprep.subr.bf16.mxu0 0
      %940 = vmatpush1.bf16.msra.mxu0 0
      %941 = vmatprep.subr.bf16.mxu0 0
      %942 = vmatpush1.bf16.msra.mxu0 0
      %943 = vmatprep.subr.bf16.mxu0 0
      %944 = vmatpush1.bf16.msra.mxu0 0
      %945 = vmatprep.subr.bf16.mxu0 0
      %946 = vmatpush1.bf16.msra.mxu0 0
      %947 = vmatprep.subr.bf16.mxu0 0
      %948 = vmatpush1.bf16.msra.mxu0 0
      %949 = vmatprep.subr.bf16.mxu0 %v930
      %950 = vmatpush1.bf16.msra.mxu0 %v927
      %951 = vmatprep.subr.bf16.mxu0 0
      %952 = vmatpush2.bf16.msra.mxu0 0
      %953 = vmatprep.subr.bf16.mxu0 0
      %954 = vmatpush2.bf16.msra.mxu0 0
      %955 = vmatprep.subr.bf16.mxu0 0
      %956 = vmatpush2.bf16.msra.mxu0 0
      %957 = vmatprep.subr.bf16.mxu0 0
      %958 = vmatpush2.bf16.msra.mxu0 0
      %959 = vmatprep.subr.bf16.mxu0 0
      %960 = vmatpush2.bf16.msra.mxu0 0
      %961 = vmatprep.subr.bf16.mxu0 0
      %962 = vmatpush2.bf16.msra.mxu0 0
      %963 = vmatprep.subr.bf16.mxu0 0
      %964 = vmatpush2.bf16.msra.mxu0 0
      %965 = vmatprep.subr.bf16.mxu0 0
      %966 = vmatpush2.bf16.msra.mxu0 0
      %967 = vmatprep.mubr.bf16.mxu0 0
      %968 = vmatmul.mubr.bf16.gmra.mxu0 %v924
      %v969 = vpop.f32.mrf.mxu0
      %v970 = vadd.f32 0.0, %v969
      %v971 = vpop.f32.mrf.mxu0
      %v972 = vadd.f32 0.0, %v971
      %v973 = vpop.f32.mrf.mxu0
      %v974 = vpop.f32.mrf.mxu0
      %975 = vdwg.mxu0
      %976 = vmatprep.subr.bf16.mxu0 0
      %977 = vmatpush1.bf16.msra.mxu0 0
      %978 = vmatprep.subr.bf16.mxu0 0
      %979 = vmatpush1.bf16.msra.mxu0 0
      %980 = vmatprep.subr.bf16.mxu0 0
      %981 = vmatpush1.bf16.msra.mxu0 0
      %982 = vmatprep.subr.bf16.mxu0 0
      %983 = vmatpush1.bf16.msra.mxu0 0
      %984 = vmatprep.subr.bf16.mxu0 0
      %985 = vmatpush1.bf16.msra.mxu0 0
      %986 = vmatprep.subr.bf16.mxu0 0
      %987 = vmatpush1.bf16.msra.mxu0 0
      %988 = vmatprep.subr.bf16.mxu0 0
      %989 = vmatpush1.bf16.msra.mxu0 0
      %990 = vmatprep.subr.bf16.mxu0 0
      %991 = vmatpush1.bf16.msra.mxu0 %v933
      %992 = vmatprep.subr.bf16.mxu0 0
      %993 = vmatpush2.bf16.msra.mxu0 0
      %994 = vmatprep.subr.bf16.mxu0 0
      %995 = vmatpush2.bf16.msra.mxu0 0
      %996 = vmatprep.subr.bf16.mxu0 0
      %997 = vmatpush2.bf16.msra.mxu0 0
      %998 = vmatprep.subr.bf16.mxu0 0
      %999 = vmatpush2.bf16.msra.mxu0 0
      %1000 = vmatprep.subr.bf16.mxu0 0
      %1001 = vmatpush2.bf16.msra.mxu0 0
      %1002 = vmatprep.subr.bf16.mxu0 0
      %1003 = vmatpush2.bf16.msra.mxu0 0
      %1004 = vmatprep.subr.bf16.mxu0 0
      %1005 = vmatpush2.bf16.msra.mxu0 0
      %1006 = vmatprep.subr.bf16.mxu0 0
      %1007 = vmatpush2.bf16.msra.mxu0 0
      %1008 = vmatprep.mubr.bf16.mxu0 0
      %1009 = vmatmul.mubr.bf16.gmra.mxu0 %v924
      %v1010 = vpop.f32.mrf.mxu0
      %v1011 = vadd.f32 0.0, %v1010
      %v1012 = vpop.f32.mrf.mxu0
      %v1013 = vpop.f32.mrf.mxu0
      %v1014 = vpop.f32.mrf.mxu0
      %1015 = vdwg.mxu0
      %v1016 = vadd.f32 %v909, %v970
      %v1017 = vadd.f32 %v910, %v972
      %v1018 = vadd.f32 %v911, %v1011
      %s1019 = scalar_lea.vmem %s4, 10
      %v1020 = vld [vmem:[%s1019] sm:$0x3]
      %1021 = vrot.lane.b32.xlu0 %v491, 87
      %v1022 = vpop.permute.xlu0 %1021
      %1023 = vrot.lane.b32.xlu0 %v492, 87
      %v1024 = vpop.permute.xlu0 %1023
      %1025 = vrot.lane.b32.xlu0 %v493, 87
      %v1026 = vpop.permute.xlu0 %1025
      %vm1027 = vcmask 711680
      %v1028 = vsel %vm1027, %v1022, %v1024
      %v1029 = vsel %vm1027, %v1024, %v1026
      %v1031 = vsel %vm337, %v1020, 0
      %v1034 = vsel %vm341, %v1028, 0
      %v1037 = vsel %vm341, %v1029, 0
      %v1040 = vsel %vm341, %v1026, 0
      %1042 = vmatprep.subr.bf16.mxu0 0
      %1043 = vmatpush1.bf16.msra.mxu0 0
      %1044 = vmatprep.subr.bf16.mxu0 0
      %1045 = vmatpush1.bf16.msra.mxu0 0
      %1046 = vmatprep.subr.bf16.mxu0 0
      %1047 = vmatpush1.bf16.msra.mxu0 0
      %1048 = vmatprep.subr.bf16.mxu0 0
      %1049 = vmatpush1.bf16.msra.mxu0 0
      %1050 = vmatprep.subr.bf16.mxu0 0
      %1051 = vmatpush1.bf16.msra.mxu0 0
      %1052 = vmatprep.subr.bf16.mxu0 0
      %1053 = vmatpush1.bf16.msra.mxu0 0
      %1054 = vmatprep.subr.bf16.mxu0 0
      %1055 = vmatpush1.bf16.msra.mxu0 0
      %1056 = vmatprep.subr.bf16.mxu0 %v1037
      %1057 = vmatpush1.bf16.msra.mxu0 %v1034
      %1058 = vmatprep.subr.bf16.mxu0 0
      %1059 = vmatpush2.bf16.msra.mxu0 0
      %1060 = vmatprep.subr.bf16.mxu0 0
      %1061 = vmatpush2.bf16.msra.mxu0 0
      %1062 = vmatprep.subr.bf16.mxu0 0
      %1063 = vmatpush2.bf16.msra.mxu0 0
      %1064 = vmatprep.subr.bf16.mxu0 0
      %1065 = vmatpush2.bf16.msra.mxu0 0
      %1066 = vmatprep.subr.bf16.mxu0 0
      %1067 = vmatpush2.bf16.msra.mxu0 0
      %1068 = vmatprep.subr.bf16.mxu0 0
      %1069 = vmatpush2.bf16.msra.mxu0 0
      %1070 = vmatprep.subr.bf16.mxu0 0
      %1071 = vmatpush2.bf16.msra.mxu0 0
      %1072 = vmatprep.subr.bf16.mxu0 0
      %1073 = vmatpush2.bf16.msra.mxu0 0
      %1074 = vmatprep.mubr.bf16.mxu0 0
      %1075 = vmatmul.mubr.bf16.gmra.mxu0 %v1031
      %v1076 = vpop.f32.mrf.mxu0
      %v1077 = vadd.f32 0.0, %v1076
      %v1078 = vpop.f32.mrf.mxu0
      %v1079 = vadd.f32 0.0, %v1078
      %v1080 = vpop.f32.mrf.mxu0
      %v1081 = vpop.f32.mrf.mxu0
      %1082 = vdwg.mxu0
      %1083 = vmatprep.subr.bf16.mxu0 0
      %1084 = vmatpush1.bf16.msra.mxu0 0
      %1085 = vmatprep.subr.bf16.mxu0 0
      %1086 = vmatpush1.bf16.msra.mxu0 0
      %1087 = vmatprep.subr.bf16.mxu0 0
      %1088 = vmatpush1.bf16.msra.mxu0 0
      %1089 = vmatprep.subr.bf16.mxu0 0
      %1090 = vmatpush1.bf16.msra.mxu0 0
      %1091 = vmatprep.subr.bf16.mxu0 0
      %1092 = vmatpush1.bf16.msra.mxu0 0
      %1093 = vmatprep.subr.bf16.mxu0 0
      %1094 = vmatpush1.bf16.msra.mxu0 0
      %1095 = vmatprep.subr.bf16.mxu0 0
      %1096 = vmatpush1.bf16.msra.mxu0 0
      %1097 = vmatprep.subr.bf16.mxu0 0
      %1098 = vmatpush1.bf16.msra.mxu0 %v1040
      %1099 = vmatprep.subr.bf16.mxu0 0
      %1100 = vmatpush2.bf16.msra.mxu0 0
      %1101 = vmatprep.subr.bf16.mxu0 0
      %1102 = vmatpush2.bf16.msra.mxu0 0
      %1103 = vmatprep.subr.bf16.mxu0 0
      %1104 = vmatpush2.bf16.msra.mxu0 0
      %1105 = vmatprep.subr.bf16.mxu0 0
      %1106 = vmatpush2.bf16.msra.mxu0 0
      %1107 = vmatprep.subr.bf16.mxu0 0
      %1108 = vmatpush2.bf16.msra.mxu0 0
      %1109 = vmatprep.subr.bf16.mxu0 0
      %1110 = vmatpush2.bf16.msra.mxu0 0
      %1111 = vmatprep.subr.bf16.mxu0 0
      %1112 = vmatpush2.bf16.msra.mxu0 0
      %1113 = vmatprep.subr.bf16.mxu0 0
      %1114 = vmatpush2.bf16.msra.mxu0 0
      %1115 = vmatprep.mubr.bf16.mxu0 0
      %1116 = vmatmul.mubr.bf16.gmra.mxu0 %v1031
      %v1117 = vpop.f32.mrf.mxu0
      %v1118 = vadd.f32 0.0, %v1117
      %v1119 = vpop.f32.mrf.mxu0
      %v1120 = vpop.f32.mrf.mxu0
      %v1121 = vpop.f32.mrf.mxu0
      %1122 = vdwg.mxu0
      %v1123 = vadd.f32 %v1016, %v1077
      %v1124 = vadd.f32 %v1017, %v1079
      %v1125 = vadd.f32 %v1018, %v1118
      %s1126 = scalar_lea.vmem %s4, 12
      %v1127 = vld [vmem:[%s1126] sm:$0x3]
      %1128 = vrot.lane.b32.xlu0 %v491, 69
      %v1129 = vpop.permute.xlu0 %1128
      %1130 = vrot.lane.b32.xlu0 %v492, 69
      %v1131 = vpop.permute.xlu0 %1130
      %1132 = vrot.lane.b32.xlu0 %v493, 69
      %v1133 = vpop.permute.xlu0 %1132
      %vm1134 = vcmask 564224
      %v1135 = vsel %vm1134, %v1129, %v1131
      %v1136 = vsel %vm1134, %v1131, %v1133
      %v1138 = vsel %vm337, %v1127, 0
      %v1141 = vsel %vm341, %v1135, 0
      %v1144 = vsel %vm341, %v1136, 0
      %v1147 = vsel %vm341, %v1133, 0
      %1149 = vmatprep.subr.bf16.mxu0 0
      %1150 = vmatpush1.bf16.msra.mxu0 0
      %1151 = vmatprep.subr.bf16.mxu0 0
      %1152 = vmatpush1.bf16.msra.mxu0 0
      %1153 = vmatprep.subr.bf16.mxu0 0
      %1154 = vmatpush1.bf16.msra.mxu0 0
      %1155 = vmatprep.subr.bf16.mxu0 0
      %1156 = vmatpush1.bf16.msra.mxu0 0
      %1157 = vmatprep.subr.bf16.mxu0 0
      %1158 = vmatpush1.bf16.msra.mxu0 0
      %1159 = vmatprep.subr.bf16.mxu0 0
      %1160 = vmatpush1.bf16.msra.mxu0 0
      %1161 = vmatprep.subr.bf16.mxu0 0
      %1162 = vmatpush1.bf16.msra.mxu0 0
      %1163 = vmatprep.subr.bf16.mxu0 %v1144
      %1164 = vmatpush1.bf16.msra.mxu0 %v1141
      %1165 = vmatprep.subr.bf16.mxu0 0
      %1166 = vmatpush2.bf16.msra.mxu0 0
      %1167 = vmatprep.subr.bf16.mxu0 0
      %1168 = vmatpush2.bf16.msra.mxu0 0
      %1169 = vmatprep.subr.bf16.mxu0 0
      %1170 = vmatpush2.bf16.msra.mxu0 0
      %1171 = vmatprep.subr.bf16.mxu0 0
      %1172 = vmatpush2.bf16.msra.mxu0 0
      %1173 = vmatprep.subr.bf16.mxu0 0
      %1174 = vmatpush2.bf16.msra.mxu0 0
      %1175 = vmatprep.subr.bf16.mxu0 0
      %1176 = vmatpush2.bf16.msra.mxu0 0
      %1177 = vmatprep.subr.bf16.mxu0 0
      %1178 = vmatpush2.bf16.msra.mxu0 0
      %1179 = vmatprep.subr.bf16.mxu0 0
      %1180 = vmatpush2.bf16.msra.mxu0 0
      %1181 = vmatprep.mubr.bf16.mxu0 0
      %1182 = vmatmul.mubr.bf16.gmra.mxu0 %v1138
      %v1183 = vpop.f32.mrf.mxu0
      %v1184 = vadd.f32 0.0, %v1183
      %v1185 = vpop.f32.mrf.mxu0
      %v1186 = vadd.f32 0.0, %v1185
      %v1187 = vpop.f32.mrf.mxu0
      %v1188 = vpop.f32.mrf.mxu0
      %1189 = vdwg.mxu0
      %1190 = vmatprep.subr.bf16.mxu0 0
      %1191 = vmatpush1.bf16.msra.mxu0 0
      %1192 = vmatprep.subr.bf16.mxu0 0
      %1193 = vmatpush1.bf16.msra.mxu0 0
      %1194 = vmatprep.subr.bf16.mxu0 0
      %1195 = vmatpush1.bf16.msra.mxu0 0
      %1196 = vmatprep.subr.bf16.mxu0 0
      %1197 = vmatpush1.bf16.msra.mxu0 0
      %1198 = vmatprep.subr.bf16.mxu0 0
      %1199 = vmatpush1.bf16.msra.mxu0 0
      %1200 = vmatprep.subr.bf16.mxu0 0
      %1201 = vmatpush1.bf16.msra.mxu0 0
      %1202 = vmatprep.subr.bf16.mxu0 0
      %1203 = vmatpush1.bf16.msra.mxu0 0
      %1204 = vmatprep.subr.bf16.mxu0 0
      %1205 = vmatpush1.bf16.msra.mxu0 %v1147
      %1206 = vmatprep.subr.bf16.mxu0 0
      %1207 = vmatpush2.bf16.msra.mxu0 0
      %1208 = vmatprep.subr.bf16.mxu0 0
      %1209 = vmatpush2.bf16.msra.mxu0 0
      %1210 = vmatprep.subr.bf16.mxu0 0
      %1211 = vmatpush2.bf16.msra.mxu0 0
      %1212 = vmatprep.subr.bf16.mxu0 0
      %1213 = vmatpush2.bf16.msra.mxu0 0
      %1214 = vmatprep.subr.bf16.mxu0 0
      %1215 = vmatpush2.bf16.msra.mxu0 0
      %1216 = vmatprep.subr.bf16.mxu0 0
      %1217 = vmatpush2.bf16.msra.mxu0 0
      %1218 = vmatprep.subr.bf16.mxu0 0
      %1219 = vmatpush2.bf16.msra.mxu0 0
      %1220 = vmatprep.subr.bf16.mxu0 0
      %1221 = vmatpush2.bf16.msra.mxu0 0
      %1222 = vmatprep.mubr.bf16.mxu0 0
      %1223 = vmatmul.mubr.bf16.gmra.mxu0 %v1138
      %v1224 = vpop.f32.mrf.mxu0
      %v1225 = vadd.f32 0.0, %v1224
      %v1226 = vpop.f32.mrf.mxu0
      %v1227 = vpop.f32.mrf.mxu0
      %v1228 = vpop.f32.mrf.mxu0
      %1229 = vdwg.mxu0
      %v1230 = vadd.f32 %v1123, %v1184
      %v1231 = vadd.f32 %v1124, %v1186
      %v1232 = vadd.f32 %v1125, %v1225
      %s1233 = scalar_lea.vmem %s4, 14
      %v1234 = vld [vmem:[%s1233] sm:$0x3]
      %1235 = vrot.lane.b32.xlu0 %v491, 68
      %v1236 = vpop.permute.xlu0 %1235
      %1237 = vrot.lane.b32.xlu0 %v492, 68
      %v1238 = vpop.permute.xlu0 %1237
      %1239 = vrot.lane.b32.xlu0 %v493, 68
      %v1240 = vpop.permute.xlu0 %1239
      %vm1241 = vcmask 556032
      %v1242 = vsel %vm1241, %v1236, %v1238
      %v1243 = vsel %vm1241, %v1238, %v1240
      %v1245 = vsel %vm337, %v1234, 0
      %v1248 = vsel %vm341, %v1242, 0
      %v1251 = vsel %vm341, %v1243, 0
      %v1254 = vsel %vm341, %v1240, 0
      %1256 = vmatprep.subr.bf16.mxu0 0
      %1257 = vmatpush1.bf16.msra.mxu0 0
      %1258 = vmatprep.subr.bf16.mxu0 0
      %1259 = vmatpush1.bf16.msra.mxu0 0
      %1260 = vmatprep.subr.bf16.mxu0 0
      %1261 = vmatpush1.bf16.msra.mxu0 0
      %1262 = vmatprep.subr.bf16.mxu0 0
      %1263 = vmatpush1.bf16.msra.mxu0 0
      %1264 = vmatprep.subr.bf16.mxu0 0
      %1265 = vmatpush1.bf16.msra.mxu0 0
      %1266 = vmatprep.subr.bf16.mxu0 0
      %1267 = vmatpush1.bf16.msra.mxu0 0
      %1268 = vmatprep.subr.bf16.mxu0 0
      %1269 = vmatpush1.bf16.msra.mxu0 0
      %1270 = vmatprep.subr.bf16.mxu0 %v1251
      %1271 = vmatpush1.bf16.msra.mxu0 %v1248
      %1272 = vmatprep.subr.bf16.mxu0 0
      %1273 = vmatpush2.bf16.msra.mxu0 0
      %1274 = vmatprep.subr.bf16.mxu0 0
      %1275 = vmatpush2.bf16.msra.mxu0 0
      %1276 = vmatprep.subr.bf16.mxu0 0
      %1277 = vmatpush2.bf16.msra.mxu0 0
      %1278 = vmatprep.subr.bf16.mxu0 0
      %1279 = vmatpush2.bf16.msra.mxu0 0
      %1280 = vmatprep.subr.bf16.mxu0 0
      %1281 = vmatpush2.bf16.msra.mxu0 0
      %1282 = vmatprep.subr.bf16.mxu0 0
      %1283 = vmatpush2.bf16.msra.mxu0 0
      %1284 = vmatprep.subr.bf16.mxu0 0
      %1285 = vmatpush2.bf16.msra.mxu0 0
      %1286 = vmatprep.subr.bf16.mxu0 0
      %1287 = vmatpush2.bf16.msra.mxu0 0
      %1288 = vmatprep.mubr.bf16.mxu0 0
      %1289 = vmatmul.mubr.bf16.gmra.mxu0 %v1245
      %v1290 = vpop.f32.mrf.mxu0
      %v1291 = vadd.f32 0.0, %v1290
      %v1292 = vpop.f32.mrf.mxu0
      %v1293 = vadd.f32 0.0, %v1292
      %v1294 = vpop.f32.mrf.mxu0
      %v1295 = vpop.f32.mrf.mxu0
      %1296 = vdwg.mxu0
      %1297 = vmatprep.subr.bf16.mxu0 0
      %1298 = vmatpush1.bf16.msra.mxu0 0
      %1299 = vmatprep.subr.bf16.mxu0 0
      %1300 = vmatpush1.bf16.msra.mxu0 0
      %1301 = vmatprep.subr.bf16.mxu0 0
      %1302 = vmatpush1.bf16.msra.mxu0 0
      %1303 = vmatprep.subr.bf16.mxu0 0
      %1304 = vmatpush1.bf16.msra.mxu0 0
      %1305 = vmatprep.subr.bf16.mxu0 0
      %1306 = vmatpush1.bf16.msra.mxu0 0
      %1307 = vmatprep.subr.bf16.mxu0 0
      %1308 = vmatpush1.bf16.msra.mxu0 0
      %1309 = vmatprep.subr.bf16.mxu0 0
      %1310 = vmatpush1.bf16.msra.mxu0 0
      %1311 = vmatprep.subr.bf16.mxu0 0
      %1312 = vmatpush1.bf16.msra.mxu0 %v1254
      %1313 = vmatprep.subr.bf16.mxu0 0
      %1314 = vmatpush2.bf16.msra.mxu0 0
      %1315 = vmatprep.subr.bf16.mxu0 0
      %1316 = vmatpush2.bf16.msra.mxu0 0
      %1317 = vmatprep.subr.bf16.mxu0 0
      %1318 = vmatpush2.bf16.msra.mxu0 0
      %1319 = vmatprep.subr.bf16.mxu0 0
      %1320 = vmatpush2.bf16.msra.mxu0 0
      %1321 = vmatprep.subr.bf16.mxu0 0
      %1322 = vmatpush2.bf16.msra.mxu0 0
      %1323 = vmatprep.subr.bf16.mxu0 0
      %1324 = vmatpush2.bf16.msra.mxu0 0
      %1325 = vmatprep.subr.bf16.mxu0 0
      %1326 = vmatpush2.bf16.msra.mxu0 0
      %1327 = vmatprep.subr.bf16.mxu0 0
      %1328 = vmatpush2.bf16.msra.mxu0 0
      %1329 = vmatprep.mubr.bf16.mxu0 0
      %1330 = vmatmul.mubr.bf16.gmra.mxu0 %v1245
      %v1331 = vpop.f32.mrf.mxu0
      %v1332 = vadd.f32 0.0, %v1331
      %v1333 = vpop.f32.mrf.mxu0
      %v1334 = vpop.f32.mrf.mxu0
      %v1335 = vpop.f32.mrf.mxu0
      %1336 = vdwg.mxu0
      %v1337 = vadd.f32 %v1230, %v1291
      %v1338 = vadd.f32 %v1231, %v1293
      %v1339 = vadd.f32 %v1232, %v1332
      %s1340 = scalar_lea.vmem %s4, 16
      %v1341 = vld [vmem:[%s1340] sm:$0x3]
      %1342 = vrot.lane.b32.xlu0 %v491, 67
      %v1343 = vpop.permute.xlu0 %1342
      %1344 = vrot.lane.b32.xlu0 %v492, 67
      %v1345 = vpop.permute.xlu0 %1344
      %1346 = vrot.lane.b32.xlu0 %v493, 67
      %v1347 = vpop.permute.xlu0 %1346
      %vm1348 = vcmask 547840
      %v1349 = vsel %vm1348, %v1343, %v1345
      %v1350 = vsel %vm1348, %v1345, %v1347
      %v1352 = vsel %vm337, %v1341, 0
      %v1355 = vsel %vm341, %v1349, 0
      %v1358 = vsel %vm341, %v1350, 0
      %v1361 = vsel %vm341, %v1347, 0
      %1363 = vmatprep.subr.bf16.mxu0 0
      %1364 = vmatpush1.bf16.msra.mxu0 0
      %1365 = vmatprep.subr.bf16.mxu0 0
      %1366 = vmatpush1.bf16.msra.mxu0 0
      %1367 = vmatprep.subr.bf16.mxu0 0
      %1368 = vmatpush1.bf16.msra.mxu0 0
      %1369 = vmatprep.subr.bf16.mxu0 0
      %1370 = vmatpush1.bf16.msra.mxu0 0
      %1371 = vmatprep.subr.bf16.mxu0 0
      %1372 = vmatpush1.bf16.msra.mxu0 0
      %1373 = vmatprep.subr.bf16.mxu0 0
      %1374 = vmatpush1.bf16.msra.mxu0 0
      %1375 = vmatprep.subr.bf16.mxu0 0
      %1376 = vmatpush1.bf16.msra.mxu0 0
      %1377 = vmatprep.subr.bf16.mxu0 %v1358
      %1378 = vmatpush1.bf16.msra.mxu0 %v1355
      %1379 = vmatprep.subr.bf16.mxu0 0
      %1380 = vmatpush2.bf16.msra.mxu0 0
      %1381 = vmatprep.subr.bf16.mxu0 0
      %1382 = vmatpush2.bf16.msra.mxu0 0
      %1383 = vmatprep.subr.bf16.mxu0 0
      %1384 = vmatpush2.bf16.msra.mxu0 0
      %1385 = vmatprep.subr.bf16.mxu0 0
      %1386 = vmatpush2.bf16.msra.mxu0 0
      %1387 = vmatprep.subr.bf16.mxu0 0
      %1388 = vmatpush2.bf16.msra.mxu0 0
      %1389 = vmatprep.subr.bf16.mxu0 0
      %1390 = vmatpush2.bf16.msra.mxu0 0
      %1391 = vmatprep.subr.bf16.mxu0 0
      %1392 = vmatpush2.bf16.msra.mxu0 0
      %1393 = vmatprep.subr.bf16.mxu0 0
      %1394 = vmatpush2.bf16.msra.mxu0 0
      %1395 = vmatprep.mubr.bf16.mxu0 0
      %1396 = vmatmul.mubr.bf16.gmra.mxu0 %v1352
      %v1397 = vpop.f32.mrf.mxu0
      %v1398 = vadd.f32 0.0, %v1397
      %v1399 = vpop.f32.mrf.mxu0
      %v1400 = vadd.f32 0.0, %v1399
      %v1401 = vpop.f32.mrf.mxu0
      %v1402 = vpop.f32.mrf.mxu0
      %1403 = vdwg.mxu0
      %1404 = vmatprep.subr.bf16.mxu0 0
      %1405 = vmatpush1.bf16.msra.mxu0 0
      %1406 = vmatprep.subr.bf16.mxu0 0
      %1407 = vmatpush1.bf16.msra.mxu0 0
      %1408 = vmatprep.subr.bf16.mxu0 0
      %1409 = vmatpush1.bf16.msra.mxu0 0
      %1410 = vmatprep.subr.bf16.mxu0 0
      %1411 = vmatpush1.bf16.msra.mxu0 0
      %1412 = vmatprep.subr.bf16.mxu0 0
      %1413 = vmatpush1.bf16.msra.mxu0 0
      %1414 = vmatprep.subr.bf16.mxu0 0
      %1415 = vmatpush1.bf16.msra.mxu0 0
      %1416 = vmatprep.subr.bf16.mxu0 0
      %1417 = vmatpush1.bf16.msra.mxu0 0
      %1418 = vmatprep.subr.bf16.mxu0 0
      %1419 = vmatpush1.bf16.msra.mxu0 %v1361
      %1420 = vmatprep.subr.bf16.mxu0 0
      %1421 = vmatpush2.bf16.msra.mxu0 0
      %1422 = vmatprep.subr.bf16.mxu0 0
      %1423 = vmatpush2.bf16.msra.mxu0 0
      %1424 = vmatprep.subr.bf16.mxu0 0
      %1425 = vmatpush2.bf16.msra.mxu0 0
      %1426 = vmatprep.subr.bf16.mxu0 0
      %1427 = vmatpush2.bf16.msra.mxu0 0
      %1428 = vmatprep.subr.bf16.mxu0 0
      %1429 = vmatpush2.bf16.msra.mxu0 0
      %1430 = vmatprep.subr.bf16.mxu0 0
      %1431 = vmatpush2.bf16.msra.mxu0 0
      %1432 = vmatprep.subr.bf16.mxu0 0
      %1433 = vmatpush2.bf16.msra.mxu0 0
      %1434 = vmatprep.subr.bf16.mxu0 0
      %1435 = vmatpush2.bf16.msra.mxu0 0
      %1436 = vmatprep.mubr.bf16.mxu0 0
      %1437 = vmatmul.mubr.bf16.gmra.mxu0 %v1352
      %v1438 = vpop.f32.mrf.mxu0
      %v1439 = vadd.f32 0.0, %v1438
      %v1440 = vpop.f32.mrf.mxu0
      %v1441 = vpop.f32.mrf.mxu0
      %v1442 = vpop.f32.mrf.mxu0
      %1443 = vdwg.mxu0
      %v1444 = vadd.f32 %v1337, %v1398
      %v1445 = vadd.f32 %v1338, %v1400
      %v1446 = vadd.f32 %v1339, %v1439
      %v1447 = vld [vmem:[%s5] sm:$0xf]
      %1449 = vset.pattern.permute.xlu0 0
      %1450 = vperm.xlu0 %1449, %v1447
      %v1451 = vpop.permute.xlu0 %1450
      %v1453 = vadd.f32 %v1444, %v1451
      %v1454 = vadd.f32 %v1445, %v1451
      %v1455 = vadd.f32 %v1446, %v1451
      %v1456 = vmax.f32 %v1453, 0.0
      %v1457 = vmax.f32 %v1454, 0.0
      %v1458 = vmax.f32 %v1455, 0.0
      %v1459 = vmul.f32 %v1456, %v439
      %v1460 = vmul.f32 %v1457, %v443
      %v1461 = vmul.f32 %v1458, %v447
      %v1462 = vpack.c.bf16 %v1459, %v1459
      %v1463 = vpack.c.bf16 %v1460, %v1460
      %v1464 = vpack.c.bf16 %v1461, %v1461
      %v1468 = vcombine.low %v1462, %v1463
      %v1470 = vunpack.c.l.s4 1983009808
      %v1471 = vunpack.c.0.s8 %v1470
      %v1472 = vlaneseq
      %v1473 = vshrl.u32 %v1472, 7
      %v1474 = vsub.s32 %v1471, %v1473
      %v1475 = vrot.slane %v1468, %v1474
      %v1477 = vunpack.c.l.s4 1983009808
      %v1478 = vunpack.c.0.s8 %v1477
      %v1479 = vlaneseq
      %v1480 = vshrl.u32 %v1479, 7
      %v1481 = vsub.s32 %v1478, %v1480
      %v1482 = vrot.slane %v1464, %v1481
      %v1483 = vcombine.low %v1475, %v1482
      %1484 = vrot.lane.b32.xlu0 %v1483, 40
      %v1485 = vpop.permute.xlu0 %1484
      %v1486 = vrot.slane %v1485, 6
      %v1487 = vsel %vm470, %v1486, %v1485
      %vm1489 = vcmask 1041728
      %vm1490 = vcmask 1043458
      %vm1491 = vmor %vm1490, %vm1489
      %vm1492 = vcmask 848900
      %vm1493 = vmor %vm1492, %vm1491
      %1494 = vst.msk [vmem:[#allocation3] sm:$0x3f] %vm1493, %v1487
      %v1495 = vld [vmem:[%s6] sm:$0xf]
      %v1496 = vld [vmem:[%s6 + $0x4] sm:$0xf]
      %v1497 = vld [vmem:[#allocation3] sm:$0x3f]
      %s1498 = scalar_lea.vmem %s6, 8
      %v1499 = vld [vmem:[%s1498] sm:$0xf]
      %v1500 = vld [vmem:[%s1498 + $0x4] sm:$0xf]
      %v1503 = vunpack.c.l.b16 %v1499
      %v1504 = vunpack.c.l.b16 %v1500
      %v1505 = vpack.c.b16 %v1504, %v1503
      %v1507 = vcombine.high %v1497, %v1497
      %v1509 = vunpack.c.l.s4 1983009808
      %v1510 = vunpack.c.0.s8 %v1509
      %v1511 = vlaneseq
      %v1512 = vshrl.u32 %v1511, 7
      %v1513 = vsub.s32 %v1510, %v1512
      %v1514 = vrot.slane %v1497, %v1513
      %v1516 = vunpack.c.l.s4 1983009808
      %v1517 = vunpack.c.0.s8 %v1516
      %v1518 = vlaneseq
      %v1519 = vshrl.u32 %v1518, 7
      %v1520 = vsub.s32 %v1517, %v1519
      %v1521 = vrot.slane %v1507, %v1520
      %v1522 = vcombine.high %v1514, %v1514
      %1523 = vrot.lane.b32.xlu0 %v1514, 108
      %v1524 = vpop.permute.xlu0 %1523
      %1525 = vrot.lane.b32.xlu0 %v1522, 108
      %v1526 = vpop.permute.xlu0 %1525
      %1527 = vrot.lane.b32.xlu0 %v1521, 108
      %v1528 = vpop.permute.xlu0 %1527
      %v1529 = vsel %vm500, %v1524, %v1526
      %v1530 = vsel %vm500, %v1526, %v1528
      %vm1531 = vcmask 31744
      %v1533 = vsel %vm1531, %v1505, 0
      %vm1535 = vcmask 1041408
      %v1537 = vsel %vm1535, %v1529, 0
      %v1540 = vsel %vm1535, %v1530, 0
      %v1543 = vsel %vm1535, %v1528, 0
      %1545 = vmatprep.subr.bf16.mxu0 0
      %1546 = vmatpush1.bf16.msra.mxu0 0
      %1547 = vmatprep.subr.bf16.mxu0 0
      %1548 = vmatpush1.bf16.msra.mxu0 0
      %1549 = vmatprep.subr.bf16.mxu0 0
      %1550 = vmatpush1.bf16.msra.mxu0 0
      %1551 = vmatprep.subr.bf16.mxu0 0
      %1552 = vmatpush1.bf16.msra.mxu0 0
      %1553 = vmatprep.subr.bf16.mxu0 0
      %1554 = vmatpush1.bf16.msra.mxu0 0
      %1555 = vmatprep.subr.bf16.mxu0 0
      %1556 = vmatpush1.bf16.msra.mxu0 0
      %1557 = vmatprep.subr.bf16.mxu0 0
      %1558 = vmatpush1.bf16.msra.mxu0 0
      %1559 = vmatprep.subr.bf16.mxu0 %v1540
      %1560 = vmatpush1.bf16.msra.mxu0 %v1537
      %1561 = vmatprep.subr.bf16.mxu0 0
      %1562 = vmatpush2.bf16.msra.mxu0 0
      %1563 = vmatprep.subr.bf16.mxu0 0
      %1564 = vmatpush2.bf16.msra.mxu0 0
      %1565 = vmatprep.subr.bf16.mxu0 0
      %1566 = vmatpush2.bf16.msra.mxu0 0
      %1567 = vmatprep.subr.bf16.mxu0 0
      %1568 = vmatpush2.bf16.msra.mxu0 0
      %1569 = vmatprep.subr.bf16.mxu0 0
      %1570 = vmatpush2.bf16.msra.mxu0 0
      %1571 = vmatprep.subr.bf16.mxu0 0
      %1572 = vmatpush2.bf16.msra.mxu0 0
      %1573 = vmatprep.subr.bf16.mxu0 0
      %1574 = vmatpush2.bf16.msra.mxu0 0
      %1575 = vmatprep.subr.bf16.mxu0 0
      %1576 = vmatpush2.bf16.msra.mxu0 0
      %1577 = vmatprep.mubr.bf16.mxu0 0
      %1578 = vmatmul.mubr.bf16.gmra.mxu0 %v1533
      %v1579 = vpop.f32.mrf.mxu0
      %v1580 = vadd.f32 0.0, %v1579
      %v1581 = vpop.f32.mrf.mxu0
      %v1582 = vadd.f32 0.0, %v1581
      %v1583 = vpop.f32.mrf.mxu0
      %v1584 = vadd.f32 0.0, %v1583
      %v1585 = vpop.f32.mrf.mxu0
      %v1586 = vadd.f32 0.0, %v1585
      %1587 = vdwg.mxu0
      %1588 = vmatprep.subr.bf16.mxu0 0
      %1589 = vmatpush1.bf16.msra.mxu0 0
      %1590 = vmatprep.subr.bf16.mxu0 0
      %1591 = vmatpush1.bf16.msra.mxu0 0
      %1592 = vmatprep.subr.bf16.mxu0 0
      %1593 = vmatpush1.bf16.msra.mxu0 0
      %1594 = vmatprep.subr.bf16.mxu0 0
      %1595 = vmatpush1.bf16.msra.mxu0 0
      %1596 = vmatprep.subr.bf16.mxu0 0
      %1597 = vmatpush1.bf16.msra.mxu0 0
      %1598 = vmatprep.subr.bf16.mxu0 0
      %1599 = vmatpush1.bf16.msra.mxu0 0
      %1600 = vmatprep.subr.bf16.mxu0 0
      %1601 = vmatpush1.bf16.msra.mxu0 0
      %1602 = vmatprep.subr.bf16.mxu0 0
      %1603 = vmatpush1.bf16.msra.mxu0 %v1543
      %1604 = vmatprep.subr.bf16.mxu0 0
      %1605 = vmatpush2.bf16.msra.mxu0 0
      %1606 = vmatprep.subr.bf16.mxu0 0
      %1607 = vmatpush2.bf16.msra.mxu0 0
      %1608 = vmatprep.subr.bf16.mxu0 0
      %1609 = vmatpush2.bf16.msra.mxu0 0
      %1610 = vmatprep.subr.bf16.mxu0 0
      %1611 = vmatpush2.bf16.msra.mxu0 0
      %1612 = vmatprep.subr.bf16.mxu0 0
      %1613 = vmatpush2.bf16.msra.mxu0 0
      %1614 = vmatprep.subr.bf16.mxu0 0
      %1615 = vmatpush2.bf16.msra.mxu0 0
      %1616 = vmatprep.subr.bf16.mxu0 0
      %1617 = vmatpush2.bf16.msra.mxu0 0
      %1618 = vmatprep.subr.bf16.mxu0 0
      %1619 = vmatpush2.bf16.msra.mxu0 0
      %1620 = vmatprep.mubr.bf16.mxu0 0
      %1621 = vmatmul.mubr.bf16.gmra.mxu0 %v1533
      %v1622 = vpop.f32.mrf.mxu0
      %v1623 = vadd.f32 0.0, %v1622
      %v1624 = vpop.f32.mrf.mxu0
      %v1625 = vpop.f32.mrf.mxu0
      %v1626 = vadd.f32 0.0, %v1625
      %v1627 = vpop.f32.mrf.mxu0
      %1628 = vdwg.mxu0
      %v1631 = vunpack.c.l.b16 %v1495
      %v1632 = vunpack.c.l.b16 %v1496
      %v1633 = vpack.c.b16 %v1632, %v1631
      %1634 = vrot.lane.b32.xlu0 %v1514, 109
      %v1635 = vpop.permute.xlu0 %1634
      %1636 = vrot.lane.b32.xlu0 %v1522, 109
      %v1637 = vpop.permute.xlu0 %1636
      %1638 = vrot.lane.b32.xlu0 %v1521, 109
      %v1639 = vpop.permute.xlu0 %1638
      %v1640 = vsel %vm602, %v1635, %v1637
      %v1641 = vsel %vm602, %v1637, %v1639
      %v1643 = vsel %vm1531, %v1633, 0
      %v1646 = vsel %vm1535, %v1640, 0
      %v1649 = vsel %vm1535, %v1641, 0
      %v1652 = vsel %vm1535, %v1639, 0
      %1654 = vmatprep.subr.bf16.mxu0 0
      %1655 = vmatpush1.bf16.msra.mxu0 0
      %1656 = vmatprep.subr.bf16.mxu0 0
      %1657 = vmatpush1.bf16.msra.mxu0 0
      %1658 = vmatprep.subr.bf16.mxu0 0
      %1659 = vmatpush1.bf16.msra.mxu0 0
      %1660 = vmatprep.subr.bf16.mxu0 0
      %1661 = vmatpush1.bf16.msra.mxu0 0
      %1662 = vmatprep.subr.bf16.mxu0 0
      %1663 = vmatpush1.bf16.msra.mxu0 0
      %1664 = vmatprep.subr.bf16.mxu0 0
      %1665 = vmatpush1.bf16.msra.mxu0 0
      %1666 = vmatprep.subr.bf16.mxu0 0
      %1667 = vmatpush1.bf16.msra.mxu0 0
      %1668 = vmatprep.subr.bf16.mxu0 %v1649
      %1669 = vmatpush1.bf16.msra.mxu0 %v1646
      %1670 = vmatprep.subr.bf16.mxu0 0
      %1671 = vmatpush2.bf16.msra.mxu0 0
      %1672 = vmatprep.subr.bf16.mxu0 0
      %1673 = vmatpush2.bf16.msra.mxu0 0
      %1674 = vmatprep.subr.bf16.mxu0 0
      %1675 = vmatpush2.bf16.msra.mxu0 0
      %1676 = vmatprep.subr.bf16.mxu0 0
      %1677 = vmatpush2.bf16.msra.mxu0 0
      %1678 = vmatprep.subr.bf16.mxu0 0
      %1679 = vmatpush2.bf16.msra.mxu0 0
      %1680 = vmatprep.subr.bf16.mxu0 0
      %1681 = vmatpush2.bf16.msra.mxu0 0
      %1682 = vmatprep.subr.bf16.mxu0 0
      %1683 = vmatpush2.bf16.msra.mxu0 0
      %1684 = vmatprep.subr.bf16.mxu0 0
      %1685 = vmatpush2.bf16.msra.mxu0 0
      %1686 = vmatprep.mubr.bf16.mxu0 0
      %1687 = vmatmul.mubr.bf16.gmra.mxu0 %v1643
      %v1688 = vpop.f32.mrf.mxu0
      %v1689 = vadd.f32 %v1580, %v1688
      %v1690 = vpop.f32.mrf.mxu0
      %v1691 = vadd.f32 %v1582, %v1690
      %v1692 = vpop.f32.mrf.mxu0
      %v1693 = vadd.f32 %v1584, %v1692
      %v1694 = vpop.f32.mrf.mxu0
      %v1695 = vadd.f32 %v1586, %v1694
      %1696 = vdwg.mxu0
      %1697 = vmatprep.subr.bf16.mxu0 0
      %1698 = vmatpush1.bf16.msra.mxu0 0
      %1699 = vmatprep.subr.bf16.mxu0 0
      %1700 = vmatpush1.bf16.msra.mxu0 0
      %1701 = vmatprep.subr.bf16.mxu0 0
      %1702 = vmatpush1.bf16.msra.mxu0 0
      %1703 = vmatprep.subr.bf16.mxu0 0
      %1704 = vmatpush1.bf16.msra.mxu0 0
      %1705 = vmatprep.subr.bf16.mxu0 0
      %1706 = vmatpush1.bf16.msra.mxu0 0
      %1707 = vmatprep.subr.bf16.mxu0 0
      %1708 = vmatpush1.bf16.msra.mxu0 0
      %1709 = vmatprep.subr.bf16.mxu0 0
      %1710 = vmatpush1.bf16.msra.mxu0 0
      %1711 = vmatprep.subr.bf16.mxu0 0
      %1712 = vmatpush1.bf16.msra.mxu0 %v1652
      %1713 = vmatprep.subr.bf16.mxu0 0
      %1714 = vmatpush2.bf16.msra.mxu0 0
      %1715 = vmatprep.subr.bf16.mxu0 0
      %1716 = vmatpush2.bf16.msra.mxu0 0
      %1717 = vmatprep.subr.bf16.mxu0 0
      %1718 = vmatpush2.bf16.msra.mxu0 0
      %1719 = vmatprep.subr.bf16.mxu0 0
      %1720 = vmatpush2.bf16.msra.mxu0 0
      %1721 = vmatprep.subr.bf16.mxu0 0
      %1722 = vmatpush2.bf16.msra.mxu0 0
      %1723 = vmatprep.subr.bf16.mxu0 0
      %1724 = vmatpush2.bf16.msra.mxu0 0
      %1725 = vmatprep.subr.bf16.mxu0 0
      %1726 = vmatpush2.bf16.msra.mxu0 0
      %1727 = vmatprep.subr.bf16.mxu0 0
      %1728 = vmatpush2.bf16.msra.mxu0 0
      %1729 = vmatprep.mubr.bf16.mxu0 0
      %1730 = vmatmul.mubr.bf16.gmra.mxu0 %v1643
      %v1731 = vpop.f32.mrf.mxu0
      %v1732 = vadd.f32 %v1623, %v1731
      %v1733 = vpop.f32.mrf.mxu0
      %v1734 = vpop.f32.mrf.mxu0
      %v1735 = vadd.f32 %v1626, %v1734
      %v1736 = vpop.f32.mrf.mxu0
      %1737 = vdwg.mxu0
      %s1738 = scalar_lea.vmem %s6, 16
      %v1739 = vld [vmem:[%s1738] sm:$0xf]
      %v1740 = vld [vmem:[%s1738 + $0x4] sm:$0xf]
      %v1741 = vld [vmem:[#allocation3] sm:$0x3f]
      %v1744 = vunpack.c.l.b16 %v1739
      %v1745 = vunpack.c.l.b16 %v1740
      %v1746 = vpack.c.b16 %v1745, %v1744
      %v1748 = vcombine.high %v1741, %v1741
      %v1750 = vunpack.c.l.s4 1983009808
      %v1751 = vunpack.c.0.s8 %v1750
      %v1752 = vlaneseq
      %v1753 = vshrl.u32 %v1752, 7
      %v1754 = vsub.s32 %v1751, %v1753
      %v1755 = vrot.slane %v1741, %v1754
      %v1757 = vunpack.c.l.s4 1983009808
      %v1758 = vunpack.c.0.s8 %v1757
      %v1759 = vlaneseq
      %v1760 = vshrl.u32 %v1759, 7
      %v1761 = vsub.s32 %v1758, %v1760
      %v1762 = vrot.slane %v1748, %v1761
      %v1763 = vcombine.high %v1755, %v1755
      %1764 = vrot.lane.b32.xlu0 %v1755, 107
      %v1765 = vpop.permute.xlu0 %1764
      %1766 = vrot.lane.b32.xlu0 %v1763, 107
      %v1767 = vpop.permute.xlu0 %1766
      %1768 = vrot.lane.b32.xlu0 %v1762, 107
      %v1769 = vpop.permute.xlu0 %1768
      %v1770 = vsel %vm706, %v1765, %v1767
      %v1771 = vsel %vm706, %v1767, %v1769
      %v1773 = vsel %vm1531, %v1746, 0
      %v1776 = vsel %vm1535, %v1770, 0
      %v1779 = vsel %vm1535, %v1771, 0
      %v1782 = vsel %vm1535, %v1769, 0
      %1784 = vmatprep.subr.bf16.mxu0 0
      %1785 = vmatpush1.bf16.msra.mxu0 0
      %1786 = vmatprep.subr.bf16.mxu0 0
      %1787 = vmatpush1.bf16.msra.mxu0 0
      %1788 = vmatprep.subr.bf16.mxu0 0
      %1789 = vmatpush1.bf16.msra.mxu0 0
      %1790 = vmatprep.subr.bf16.mxu0 0
      %1791 = vmatpush1.bf16.msra.mxu0 0
      %1792 = vmatprep.subr.bf16.mxu0 0
      %1793 = vmatpush1.bf16.msra.mxu0 0
      %1794 = vmatprep.subr.bf16.mxu0 0
      %1795 = vmatpush1.bf16.msra.mxu0 0
      %1796 = vmatprep.subr.bf16.mxu0 0
      %1797 = vmatpush1.bf16.msra.mxu0 0
      %1798 = vmatprep.subr.bf16.mxu0 %v1779
      %1799 = vmatpush1.bf16.msra.mxu0 %v1776
      %1800 = vmatprep.subr.bf16.mxu0 0
      %1801 = vmatpush2.bf16.msra.mxu0 0
      %1802 = vmatprep.subr.bf16.mxu0 0
      %1803 = vmatpush2.bf16.msra.mxu0 0
      %1804 = vmatprep.subr.bf16.mxu0 0
      %1805 = vmatpush2.bf16.msra.mxu0 0
      %1806 = vmatprep.subr.bf16.mxu0 0
      %1807 = vmatpush2.bf16.msra.mxu0 0
      %1808 = vmatprep.subr.bf16.mxu0 0
      %1809 = vmatpush2.bf16.msra.mxu0 0
      %1810 = vmatprep.subr.bf16.mxu0 0
      %1811 = vmatpush2.bf16.msra.mxu0 0
      %1812 = vmatprep.subr.bf16.mxu0 0
      %1813 = vmatpush2.bf16.msra.mxu0 0
      %1814 = vmatprep.subr.bf16.mxu0 0
      %1815 = vmatpush2.bf16.msra.mxu0 0
      %1816 = vmatprep.mubr.bf16.mxu0 0
      %1817 = vmatmul.mubr.bf16.gmra.mxu0 %v1773
      %v1818 = vpop.f32.mrf.mxu0
      %v1819 = vadd.f32 0.0, %v1818
      %v1820 = vpop.f32.mrf.mxu0
      %v1821 = vadd.f32 0.0, %v1820
      %v1822 = vpop.f32.mrf.mxu0
      %v1823 = vadd.f32 0.0, %v1822
      %v1824 = vpop.f32.mrf.mxu0
      %v1825 = vadd.f32 0.0, %v1824
      %1826 = vdwg.mxu0
      %1827 = vmatprep.subr.bf16.mxu0 0
      %1828 = vmatpush1.bf16.msra.mxu0 0
      %1829 = vmatprep.subr.bf16.mxu0 0
      %1830 = vmatpush1.bf16.msra.mxu0 0
      %1831 = vmatprep.subr.bf16.mxu0 0
      %1832 = vmatpush1.bf16.msra.mxu0 0
      %1833 = vmatprep.subr.bf16.mxu0 0
      %1834 = vmatpush1.bf16.msra.mxu0 0
      %1835 = vmatprep.subr.bf16.mxu0 0
      %1836 = vmatpush1.bf16.msra.mxu0 0
      %1837 = vmatprep.subr.bf16.mxu0 0
      %1838 = vmatpush1.bf16.msra.mxu0 0
      %1839 = vmatprep.subr.bf16.mxu0 0
      %1840 = vmatpush1.bf16.msra.mxu0 0
      %1841 = vmatprep.subr.bf16.mxu0 0
      %1842 = vmatpush1.bf16.msra.mxu0 %v1782
      %1843 = vmatprep.subr.bf16.mxu0 0
      %1844 = vmatpush2.bf16.msra.mxu0 0
      %1845 = vmatprep.subr.bf16.mxu0 0
      %1846 = vmatpush2.bf16.msra.mxu0 0
      %1847 = vmatprep.subr.bf16.mxu0 0
      %1848 = vmatpush2.bf16.msra.mxu0 0
      %1849 = vmatprep.subr.bf16.mxu0 0
      %1850 = vmatpush2.bf16.msra.mxu0 0
      %1851 = vmatprep.subr.bf16.mxu0 0
      %1852 = vmatpush2.bf16.msra.mxu0 0
      %1853 = vmatprep.subr.bf16.mxu0 0
      %1854 = vmatpush2.bf16.msra.mxu0 0
      %1855 = vmatprep.subr.bf16.mxu0 0
      %1856 = vmatpush2.bf16.msra.mxu0 0
      %1857 = vmatprep.subr.bf16.mxu0 0
      %1858 = vmatpush2.bf16.msra.mxu0 0
      %1859 = vmatprep.mubr.bf16.mxu0 0
      %1860 = vmatmul.mubr.bf16.gmra.mxu0 %v1773
      %v1861 = vpop.f32.mrf.mxu0
      %v1862 = vadd.f32 0.0, %v1861
      %v1863 = vpop.f32.mrf.mxu0
      %v1864 = vpop.f32.mrf.mxu0
      %v1865 = vadd.f32 0.0, %v1864
      %v1866 = vpop.f32.mrf.mxu0
      %1867 = vdwg.mxu0
      %v1868 = vadd.f32 %v1689, %v1819
      %v1869 = vadd.f32 %v1691, %v1821
      %v1870 = vadd.f32 %v1732, %v1862
      %v1871 = vadd.f32 %v1693, %v1823
      %v1872 = vadd.f32 %v1695, %v1825
      %v1873 = vadd.f32 %v1735, %v1865
      %s1874 = scalar_lea.vmem %s6, 24
      %v1875 = vld [vmem:[%s1874] sm:$0xf]
      %v1876 = vld [vmem:[%s1874 + $0x4] sm:$0xf]
      %v1877 = vld [vmem:[#allocation3] sm:$0x3f]
      %v1880 = vunpack.c.l.b16 %v1875
      %v1881 = vunpack.c.l.b16 %v1876
      %v1882 = vpack.c.b16 %v1881, %v1880
      %v1884 = vcombine.high %v1877, %v1877
      %v1886 = vunpack.c.l.s4 1983009808
      %v1887 = vunpack.c.0.s8 %v1886
      %v1888 = vlaneseq
      %v1889 = vshrl.u32 %v1888, 7
      %v1890 = vsub.s32 %v1887, %v1889
      %v1891 = vrot.slane %v1877, %v1890
      %v1893 = vunpack.c.l.s4 1983009808
      %v1894 = vunpack.c.0.s8 %v1893
      %v1895 = vlaneseq
      %v1896 = vshrl.u32 %v1895, 7
      %v1897 = vsub.s32 %v1894, %v1896
      %v1898 = vrot.slane %v1884, %v1897
      %v1899 = vcombine.high %v1891, %v1891
      %1900 = vrot.lane.b32.xlu0 %v1891, 89
      %v1901 = vpop.permute.xlu0 %1900
      %1902 = vrot.lane.b32.xlu0 %v1899, 89
      %v1903 = vpop.permute.xlu0 %1902
      %1904 = vrot.lane.b32.xlu0 %v1898, 89
      %v1905 = vpop.permute.xlu0 %1904
      %v1906 = vsel %vm813, %v1901, %v1903
      %v1907 = vsel %vm813, %v1903, %v1905
      %v1909 = vsel %vm1531, %v1882, 0
      %v1912 = vsel %vm1535, %v1906, 0
      %v1915 = vsel %vm1535, %v1907, 0
      %v1918 = vsel %vm1535, %v1905, 0
      %1920 = vmatprep.subr.bf16.mxu0 0
      %1921 = vmatpush1.bf16.msra.mxu0 0
      %1922 = vmatprep.subr.bf16.mxu0 0
      %1923 = vmatpush1.bf16.msra.mxu0 0
      %1924 = vmatprep.subr.bf16.mxu0 0
      %1925 = vmatpush1.bf16.msra.mxu0 0
      %1926 = vmatprep.subr.bf16.mxu0 0
      %1927 = vmatpush1.bf16.msra.mxu0 0
      %1928 = vmatprep.subr.bf16.mxu0 0
      %1929 = vmatpush1.bf16.msra.mxu0 0
      %1930 = vmatprep.subr.bf16.mxu0 0
      %1931 = vmatpush1.bf16.msra.mxu0 0
      %1932 = vmatprep.subr.bf16.mxu0 0
      %1933 = vmatpush1.bf16.msra.mxu0 0
      %1934 = vmatprep.subr.bf16.mxu0 %v1915
      %1935 = vmatpush1.bf16.msra.mxu0 %v1912
      %1936 = vmatprep.subr.bf16.mxu0 0
      %1937 = vmatpush2.bf16.msra.mxu0 0
      %1938 = vmatprep.subr.bf16.mxu0 0
      %1939 = vmatpush2.bf16.msra.mxu0 0
      %1940 = vmatprep.subr.bf16.mxu0 0
      %1941 = vmatpush2.bf16.msra.mxu0 0
      %1942 = vmatprep.subr.bf16.mxu0 0
      %1943 = vmatpush2.bf16.msra.mxu0 0
      %1944 = vmatprep.subr.bf16.mxu0 0
      %1945 = vmatpush2.bf16.msra.mxu0 0
      %1946 = vmatprep.subr.bf16.mxu0 0
      %1947 = vmatpush2.bf16.msra.mxu0 0
      %1948 = vmatprep.subr.bf16.mxu0 0
      %1949 = vmatpush2.bf16.msra.mxu0 0
      %1950 = vmatprep.subr.bf16.mxu0 0
      %1951 = vmatpush2.bf16.msra.mxu0 0
      %1952 = vmatprep.mubr.bf16.mxu0 0
      %1953 = vmatmul.mubr.bf16.gmra.mxu0 %v1909
      %v1954 = vpop.f32.mrf.mxu0
      %v1955 = vadd.f32 0.0, %v1954
      %v1956 = vpop.f32.mrf.mxu0
      %v1957 = vadd.f32 0.0, %v1956
      %v1958 = vpop.f32.mrf.mxu0
      %v1959 = vadd.f32 0.0, %v1958
      %v1960 = vpop.f32.mrf.mxu0
      %v1961 = vadd.f32 0.0, %v1960
      %1962 = vdwg.mxu0
      %1963 = vmatprep.subr.bf16.mxu0 0
      %1964 = vmatpush1.bf16.msra.mxu0 0
      %1965 = vmatprep.subr.bf16.mxu0 0
      %1966 = vmatpush1.bf16.msra.mxu0 0
      %1967 = vmatprep.subr.bf16.mxu0 0
      %1968 = vmatpush1.bf16.msra.mxu0 0
      %1969 = vmatprep.subr.bf16.mxu0 0
      %1970 = vmatpush1.bf16.msra.mxu0 0
      %1971 = vmatprep.subr.bf16.mxu0 0
      %1972 = vmatpush1.bf16.msra.mxu0 0
      %1973 = vmatprep.subr.bf16.mxu0 0
      %1974 = vmatpush1.bf16.msra.mxu0 0
      %1975 = vmatprep.subr.bf16.mxu0 0
      %1976 = vmatpush1.bf16.msra.mxu0 0
      %1977 = vmatprep.subr.bf16.mxu0 0
      %1978 = vmatpush1.bf16.msra.mxu0 %v1918
      %1979 = vmatprep.subr.bf16.mxu0 0
      %1980 = vmatpush2.bf16.msra.mxu0 0
      %1981 = vmatprep.subr.bf16.mxu0 0
      %1982 = vmatpush2.bf16.msra.mxu0 0
      %1983 = vmatprep.subr.bf16.mxu0 0
      %1984 = vmatpush2.bf16.msra.mxu0 0
      %1985 = vmatprep.subr.bf16.mxu0 0
      %1986 = vmatpush2.bf16.msra.mxu0 0
      %1987 = vmatprep.subr.bf16.mxu0 0
      %1988 = vmatpush2.bf16.msra.mxu0 0
      %1989 = vmatprep.subr.bf16.mxu0 0
      %1990 = vmatpush2.bf16.msra.mxu0 0
      %1991 = vmatprep.subr.bf16.mxu0 0
      %1992 = vmatpush2.bf16.msra.mxu0 0
      %1993 = vmatprep.subr.bf16.mxu0 0
      %1994 = vmatpush2.bf16.msra.mxu0 0
      %1995 = vmatprep.mubr.bf16.mxu0 0
      %1996 = vmatmul.mubr.bf16.gmra.mxu0 %v1909
      %v1997 = vpop.f32.mrf.mxu0
      %v1998 = vadd.f32 0.0, %v1997
      %v1999 = vpop.f32.mrf.mxu0
      %v2000 = vpop.f32.mrf.mxu0
      %v2001 = vadd.f32 0.0, %v2000
      %v2002 = vpop.f32.mrf.mxu0
      %2003 = vdwg.mxu0
      %v2004 = vadd.f32 %v1868, %v1955
      %v2005 = vadd.f32 %v1869, %v1957
      %v2006 = vadd.f32 %v1870, %v1998
      %v2007 = vadd.f32 %v1871, %v1959
      %v2008 = vadd.f32 %v1872, %v1961
      %v2009 = vadd.f32 %v1873, %v2001
      %s2010 = scalar_lea.vmem %s6, 32
      %v2011 = vld [vmem:[%s2010] sm:$0xf]
      %v2012 = vld [vmem:[%s2010 + $0x4] sm:$0xf]
      %v2013 = vld [vmem:[#allocation3] sm:$0x3f]
      %v2016 = vunpack.c.l.b16 %v2011
      %v2017 = vunpack.c.l.b16 %v2012
      %v2018 = vpack.c.b16 %v2017, %v2016
      %v2020 = vcombine.high %v2013, %v2013
      %v2022 = vunpack.c.l.s4 1983009808
      %v2023 = vunpack.c.0.s8 %v2022
      %v2024 = vlaneseq
      %v2025 = vshrl.u32 %v2024, 7
      %v2026 = vsub.s32 %v2023, %v2025
      %v2027 = vrot.slane %v2013, %v2026
      %v2029 = vunpack.c.l.s4 1983009808
      %v2030 = vunpack.c.0.s8 %v2029
      %v2031 = vlaneseq
      %v2032 = vshrl.u32 %v2031, 7
      %v2033 = vsub.s32 %v2030, %v2032
      %v2034 = vrot.slane %v2020, %v2033
      %v2035 = vcombine.high %v2027, %v2027
      %2036 = vrot.lane.b32.xlu0 %v2027, 88
      %v2037 = vpop.permute.xlu0 %2036
      %2038 = vrot.lane.b32.xlu0 %v2035, 88
      %v2039 = vpop.permute.xlu0 %2038
      %2040 = vrot.lane.b32.xlu0 %v2034, 88
      %v2041 = vpop.permute.xlu0 %2040
      %v2042 = vsel %vm920, %v2037, %v2039
      %v2043 = vsel %vm920, %v2039, %v2041
      %v2045 = vsel %vm1531, %v2018, 0
      %v2048 = vsel %vm1535, %v2042, 0
      %v2051 = vsel %vm1535, %v2043, 0
      %v2054 = vsel %vm1535, %v2041, 0
      %2056 = vmatprep.subr.bf16.mxu0 0
      %2057 = vmatpush1.bf16.msra.mxu0 0
      %2058 = vmatprep.subr.bf16.mxu0 0
      %2059 = vmatpush1.bf16.msra.mxu0 0
      %2060 = vmatprep.subr.bf16.mxu0 0
      %2061 = vmatpush1.bf16.msra.mxu0 0
      %2062 = vmatprep.subr.bf16.mxu0 0
      %2063 = vmatpush1.bf16.msra.mxu0 0
      %2064 = vmatprep.subr.bf16.mxu0 0
      %2065 = vmatpush1.bf16.msra.mxu0 0
      %2066 = vmatprep.subr.bf16.mxu0 0
      %2067 = vmatpush1.bf16.msra.mxu0 0
      %2068 = vmatprep.subr.bf16.mxu0 0
      %2069 = vmatpush1.bf16.msra.mxu0 0
      %2070 = vmatprep.subr.bf16.mxu0 %v2051
      %2071 = vmatpush1.bf16.msra.mxu0 %v2048
      %2072 = vmatprep.subr.bf16.mxu0 0
      %2073 = vmatpush2.bf16.msra.mxu0 0
      %2074 = vmatprep.subr.bf16.mxu0 0
      %2075 = vmatpush2.bf16.msra.mxu0 0
      %2076 = vmatprep.subr.bf16.mxu0 0
      %2077 = vmatpush2.bf16.msra.mxu0 0
      %2078 = vmatprep.subr.bf16.mxu0 0
      %2079 = vmatpush2.bf16.msra.mxu0 0
      %2080 = vmatprep.subr.bf16.mxu0 0
      %2081 = vmatpush2.bf16.msra.mxu0 0
      %2082 = vmatprep.subr.bf16.mxu0 0
      %2083 = vmatpush2.bf16.msra.mxu0 0
      %2084 = vmatprep.subr.bf16.mxu0 0
      %2085 = vmatpush2.bf16.msra.mxu0 0
      %2086 = vmatprep.subr.bf16.mxu0 0
      %2087 = vmatpush2.bf16.msra.mxu0 0
      %2088 = vmatprep.mubr.bf16.mxu0 0
      %2089 = vmatmul.mubr.bf16.gmra.mxu0 %v2045
      %v2090 = vpop.f32.mrf.mxu0
      %v2091 = vadd.f32 0.0, %v2090
      %v2092 = vpop.f32.mrf.mxu0
      %v2093 = vadd.f32 0.0, %v2092
      %v2094 = vpop.f32.mrf.mxu0
      %v2095 = vadd.f32 0.0, %v2094
      %v2096 = vpop.f32.mrf.mxu0
      %v2097 = vadd.f32 0.0, %v2096
      %2098 = vdwg.mxu0
      %2099 = vmatprep.subr.bf16.mxu0 0
      %2100 = vmatpush1.bf16.msra.mxu0 0
      %2101 = vmatprep.subr.bf16.mxu0 0
      %2102 = vmatpush1.bf16.msra.mxu0 0
      %2103 = vmatprep.subr.bf16.mxu0 0
      %2104 = vmatpush1.bf16.msra.mxu0 0
      %2105 = vmatprep.subr.bf16.mxu0 0
      %2106 = vmatpush1.bf16.msra.mxu0 0
      %2107 = vmatprep.subr.bf16.mxu0 0
      %2108 = vmatpush1.bf16.msra.mxu0 0
      %2109 = vmatprep.subr.bf16.mxu0 0
      %2110 = vmatpush1.bf16.msra.mxu0 0
      %2111 = vmatprep.subr.bf16.mxu0 0
      %2112 = vmatpush1.bf16.msra.mxu0 0
      %2113 = vmatprep.subr.bf16.mxu0 0
      %2114 = vmatpush1.bf16.msra.mxu0 %v2054
      %2115 = vmatprep.subr.bf16.mxu0 0
      %2116 = vmatpush2.bf16.msra.mxu0 0
      %2117 = vmatprep.subr.bf16.mxu0 0
      %2118 = vmatpush2.bf16.msra.mxu0 0
      %2119 = vmatprep.subr.bf16.mxu0 0
      %2120 = vmatpush2.bf16.msra.mxu0 0
      %2121 = vmatprep.subr.bf16.mxu0 0
      %2122 = vmatpush2.bf16.msra.mxu0 0
      %2123 = vmatprep.subr.bf16.mxu0 0
      %2124 = vmatpush2.bf16.msra.mxu0 0
      %2125 = vmatprep.subr.bf16.mxu0 0
      %2126 = vmatpush2.bf16.msra.mxu0 0
      %2127 = vmatprep.subr.bf16.mxu0 0
      %2128 = vmatpush2.bf16.msra.mxu0 0
      %2129 = vmatprep.subr.bf16.mxu0 0
      %2130 = vmatpush2.bf16.msra.mxu0 0
      %2131 = vmatprep.mubr.bf16.mxu0 0
      %2132 = vmatmul.mubr.bf16.gmra.mxu0 %v2045
      %v2133 = vpop.f32.mrf.mxu0
      %v2134 = vadd.f32 0.0, %v2133
      %v2135 = vpop.f32.mrf.mxu0
      %v2136 = vpop.f32.mrf.mxu0
      %v2137 = vadd.f32 0.0, %v2136
      %v2138 = vpop.f32.mrf.mxu0
      %2139 = vdwg.mxu0
      %v2140 = vadd.f32 %v2004, %v2091
      %v2141 = vadd.f32 %v2005, %v2093
      %v2142 = vadd.f32 %v2006, %v2134
      %v2143 = vadd.f32 %v2007, %v2095
      %v2144 = vadd.f32 %v2008, %v2097
      %v2145 = vadd.f32 %v2009, %v2137
      %s2146 = scalar_lea.vmem %s6, 40
      %v2147 = vld [vmem:[%s2146] sm:$0xf]
      %v2148 = vld [vmem:[%s2146 + $0x4] sm:$0xf]
      %v2149 = vld [vmem:[#allocation3] sm:$0x3f]
      %v2152 = vunpack.c.l.b16 %v2147
      %v2153 = vunpack.c.l.b16 %v2148
      %v2154 = vpack.c.b16 %v2153, %v2152
      %v2156 = vcombine.high %v2149, %v2149
      %v2158 = vunpack.c.l.s4 1983009808
      %v2159 = vunpack.c.0.s8 %v2158
      %v2160 = vlaneseq
      %v2161 = vshrl.u32 %v2160, 7
      %v2162 = vsub.s32 %v2159, %v2161
      %v2163 = vrot.slane %v2149, %v2162
      %v2165 = vunpack.c.l.s4 1983009808
      %v2166 = vunpack.c.0.s8 %v2165
      %v2167 = vlaneseq
      %v2168 = vshrl.u32 %v2167, 7
      %v2169 = vsub.s32 %v2166, %v2168
      %v2170 = vrot.slane %v2156, %v2169
      %v2171 = vcombine.high %v2163, %v2163
      %2172 = vrot.lane.b32.xlu0 %v2163, 87
      %v2173 = vpop.permute.xlu0 %2172
      %2174 = vrot.lane.b32.xlu0 %v2171, 87
      %v2175 = vpop.permute.xlu0 %2174
      %2176 = vrot.lane.b32.xlu0 %v2170, 87
      %v2177 = vpop.permute.xlu0 %2176
      %v2178 = vsel %vm1027, %v2173, %v2175
      %v2179 = vsel %vm1027, %v2175, %v2177
      %v2181 = vsel %vm1531, %v2154, 0
      %v2184 = vsel %vm1535, %v2178, 0
      %v2187 = vsel %vm1535, %v2179, 0
      %v2190 = vsel %vm1535, %v2177, 0
      %2192 = vmatprep.subr.bf16.mxu0 0
      %2193 = vmatpush1.bf16.msra.mxu0 0
      %2194 = vmatprep.subr.bf16.mxu0 0
      %2195 = vmatpush1.bf16.msra.mxu0 0
      %2196 = vmatprep.subr.bf16.mxu0 0
      %2197 = vmatpush1.bf16.msra.mxu0 0
      %2198 = vmatprep.subr.bf16.mxu0 0
      %2199 = vmatpush1.bf16.msra.mxu0 0
      %2200 = vmatprep.subr.bf16.mxu0 0
      %2201 = vmatpush1.bf16.msra.mxu0 0
      %2202 = vmatprep.subr.bf16.mxu0 0
      %2203 = vmatpush1.bf16.msra.mxu0 0
      %2204 = vmatprep.subr.bf16.mxu0 0
      %2205 = vmatpush1.bf16.msra.mxu0 0
      %2206 = vmatprep.subr.bf16.mxu0 %v2187
      %2207 = vmatpush1.bf16.msra.mxu0 %v2184
      %2208 = vmatprep.subr.bf16.mxu0 0
      %2209 = vmatpush2.bf16.msra.mxu0 0
      %2210 = vmatprep.subr.bf16.mxu0 0
      %2211 = vmatpush2.bf16.msra.mxu0 0
      %2212 = vmatprep.subr.bf16.mxu0 0
      %2213 = vmatpush2.bf16.msra.mxu0 0
      %2214 = vmatprep.subr.bf16.mxu0 0
      %2215 = vmatpush2.bf16.msra.mxu0 0
      %2216 = vmatprep.subr.bf16.mxu0 0
      %2217 = vmatpush2.bf16.msra.mxu0 0
      %2218 = vmatprep.subr.bf16.mxu0 0
      %2219 = vmatpush2.bf16.msra.mxu0 0
      %2220 = vmatprep.subr.bf16.mxu0 0
      %2221 = vmatpush2.bf16.msra.mxu0 0
      %2222 = vmatprep.subr.bf16.mxu0 0
      %2223 = vmatpush2.bf16.msra.mxu0 0
      %2224 = vmatprep.mubr.bf16.mxu0 0
      %2225 = vmatmul.mubr.bf16.gmra.mxu0 %v2181
      %v2226 = vpop.f32.mrf.mxu0
      %v2227 = vadd.f32 0.0, %v2226
      %v2228 = vpop.f32.mrf.mxu0
      %v2229 = vadd.f32 0.0, %v2228
      %v2230 = vpop.f32.mrf.mxu0
      %v2231 = vadd.f32 0.0, %v2230
      %v2232 = vpop.f32.mrf.mxu0
      %v2233 = vadd.f32 0.0, %v2232
      %2234 = vdwg.mxu0
      %2235 = vmatprep.subr.bf16.mxu0 0
      %2236 = vmatpush1.bf16.msra.mxu0 0
      %2237 = vmatprep.subr.bf16.mxu0 0
      %2238 = vmatpush1.bf16.msra.mxu0 0
      %2239 = vmatprep.subr.bf16.mxu0 0
      %2240 = vmatpush1.bf16.msra.mxu0 0
      %2241 = vmatprep.subr.bf16.mxu0 0
      %2242 = vmatpush1.bf16.msra.mxu0 0
      %2243 = vmatprep.subr.bf16.mxu0 0
      %2244 = vmatpush1.bf16.msra.mxu0 0
      %2245 = vmatprep.subr.bf16.mxu0 0
      %2246 = vmatpush1.bf16.msra.mxu0 0
      %2247 = vmatprep.subr.bf16.mxu0 0
      %2248 = vmatpush1.bf16.msra.mxu0 0
      %2249 = vmatprep.subr.bf16.mxu0 0
      %2250 = vmatpush1.bf16.msra.mxu0 %v2190
      %2251 = vmatprep.subr.bf16.mxu0 0
      %2252 = vmatpush2.bf16.msra.mxu0 0
      %2253 = vmatprep.subr.bf16.mxu0 0
      %2254 = vmatpush2.bf16.msra.mxu0 0
      %2255 = vmatprep.subr.bf16.mxu0 0
      %2256 = vmatpush2.bf16.msra.mxu0 0
      %2257 = vmatprep.subr.bf16.mxu0 0
      %2258 = vmatpush2.bf16.msra.mxu0 0
      %2259 = vmatprep.subr.bf16.mxu0 0
      %2260 = vmatpush2.bf16.msra.mxu0 0
      %2261 = vmatprep.subr.bf16.mxu0 0
      %2262 = vmatpush2.bf16.msra.mxu0 0
      %2263 = vmatprep.subr.bf16.mxu0 0
      %2264 = vmatpush2.bf16.msra.mxu0 0
      %2265 = vmatprep.subr.bf16.mxu0 0
      %2266 = vmatpush2.bf16.msra.mxu0 0
      %2267 = vmatprep.mubr.bf16.mxu0 0
      %2268 = vmatmul.mubr.bf16.gmra.mxu0 %v2181
      %v2269 = vpop.f32.mrf.mxu0
      %v2270 = vadd.f32 0.0, %v2269
      %v2271 = vpop.f32.mrf.mxu0
      %v2272 = vpop.f32.mrf.mxu0
      %v2273 = vadd.f32 0.0, %v2272
      %v2274 = vpop.f32.mrf.mxu0
      %2275 = vdwg.mxu0
      %v2276 = vadd.f32 %v2140, %v2227
      %v2277 = vadd.f32 %v2141, %v2229
      %v2278 = vadd.f32 %v2142, %v2270
      %v2279 = vadd.f32 %v2143, %v2231
      %v2280 = vadd.f32 %v2144, %v2233
      %v2281 = vadd.f32 %v2145, %v2273
      %s2282 = scalar_lea.vmem %s6, 48
      %v2283 = vld [vmem:[%s2282] sm:$0xf]
      %v2284 = vld [vmem:[%s2282 + $0x4] sm:$0xf]
      %v2285 = vld [vmem:[#allocation3] sm:$0x3f]
      %v2288 = vunpack.c.l.b16 %v2283
      %v2289 = vunpack.c.l.b16 %v2284
      %v2290 = vpack.c.b16 %v2289, %v2288
      %v2292 = vcombine.high %v2285, %v2285
      %v2294 = vunpack.c.l.s4 1983009808
      %v2295 = vunpack.c.0.s8 %v2294
      %v2296 = vlaneseq
      %v2297 = vshrl.u32 %v2296, 7
      %v2298 = vsub.s32 %v2295, %v2297
      %v2299 = vrot.slane %v2285, %v2298
      %v2301 = vunpack.c.l.s4 1983009808
      %v2302 = vunpack.c.0.s8 %v2301
      %v2303 = vlaneseq
      %v2304 = vshrl.u32 %v2303, 7
      %v2305 = vsub.s32 %v2302, %v2304
      %v2306 = vrot.slane %v2292, %v2305
      %v2307 = vcombine.high %v2299, %v2299
      %2308 = vrot.lane.b32.xlu0 %v2299, 69
      %v2309 = vpop.permute.xlu0 %2308
      %2310 = vrot.lane.b32.xlu0 %v2307, 69
      %v2311 = vpop.permute.xlu0 %2310
      %2312 = vrot.lane.b32.xlu0 %v2306, 69
      %v2313 = vpop.permute.xlu0 %2312
      %v2314 = vsel %vm1134, %v2309, %v2311
      %v2315 = vsel %vm1134, %v2311, %v2313
      %v2317 = vsel %vm1531, %v2290, 0
      %v2320 = vsel %vm1535, %v2314, 0
      %v2323 = vsel %vm1535, %v2315, 0
      %v2326 = vsel %vm1535, %v2313, 0
      %2328 = vmatprep.subr.bf16.mxu0 0
      %2329 = vmatpush1.bf16.msra.mxu0 0
      %2330 = vmatprep.subr.bf16.mxu0 0
      %2331 = vmatpush1.bf16.msra.mxu0 0
      %2332 = vmatprep.subr.bf16.mxu0 0
      %2333 = vmatpush1.bf16.msra.mxu0 0
      %2334 = vmatprep.subr.bf16.mxu0 0
      %2335 = vmatpush1.bf16.msra.mxu0 0
      %2336 = vmatprep.subr.bf16.mxu0 0
      %2337 = vmatpush1.bf16.msra.mxu0 0
      %2338 = vmatprep.subr.bf16.mxu0 0
      %2339 = vmatpush1.bf16.msra.mxu0 0
      %2340 = vmatprep.subr.bf16.mxu0 0
      %2341 = vmatpush1.bf16.msra.mxu0 0
      %2342 = vmatprep.subr.bf16.mxu0 %v2323
      %2343 = vmatpush1.bf16.msra.mxu0 %v2320
      %2344 = vmatprep.subr.bf16.mxu0 0
      %2345 = vmatpush2.bf16.msra.mxu0 0
      %2346 = vmatprep.subr.bf16.mxu0 0
      %2347 = vmatpush2.bf16.msra.mxu0 0
      %2348 = vmatprep.subr.bf16.mxu0 0
      %2349 = vmatpush2.bf16.msra.mxu0 0
      %2350 = vmatprep.subr.bf16.mxu0 0
      %2351 = vmatpush2.bf16.msra.mxu0 0
      %2352 = vmatprep.subr.bf16.mxu0 0
      %2353 = vmatpush2.bf16.msra.mxu0 0
      %2354 = vmatprep.subr.bf16.mxu0 0
      %2355 = vmatpush2.bf16.msra.mxu0 0
      %2356 = vmatprep.subr.bf16.mxu0 0
      %2357 = vmatpush2.bf16.msra.mxu0 0
      %2358 = vmatprep.subr.bf16.mxu0 0
      %2359 = vmatpush2.bf16.msra.mxu0 0
      %2360 = vmatprep.mubr.bf16.mxu0 0
      %2361 = vmatmul.mubr.bf16.gmra.mxu0 %v2317
      %v2362 = vpop.f32.mrf.mxu0
      %v2363 = vadd.f32 0.0, %v2362
      %v2364 = vpop.f32.mrf.mxu0
      %v2365 = vadd.f32 0.0, %v2364
      %v2366 = vpop.f32.mrf.mxu0
      %v2367 = vadd.f32 0.0, %v2366
      %v2368 = vpop.f32.mrf.mxu0
      %v2369 = vadd.f32 0.0, %v2368
      %2370 = vdwg.mxu0
      %2371 = vmatprep.subr.bf16.mxu0 0
      %2372 = vmatpush1.bf16.msra.mxu0 0
      %2373 = vmatprep.subr.bf16.mxu0 0
      %2374 = vmatpush1.bf16.msra.mxu0 0
      %2375 = vmatprep.subr.bf16.mxu0 0
      %2376 = vmatpush1.bf16.msra.mxu0 0
      %2377 = vmatprep.subr.bf16.mxu0 0
      %2378 = vmatpush1.bf16.msra.mxu0 0
      %2379 = vmatprep.subr.bf16.mxu0 0
      %2380 = vmatpush1.bf16.msra.mxu0 0
      %2381 = vmatprep.subr.bf16.mxu0 0
      %2382 = vmatpush1.bf16.msra.mxu0 0
      %2383 = vmatprep.subr.bf16.mxu0 0
      %2384 = vmatpush1.bf16.msra.mxu0 0
      %2385 = vmatprep.subr.bf16.mxu0 0
      %2386 = vmatpush1.bf16.msra.mxu0 %v2326
      %2387 = vmatprep.subr.bf16.mxu0 0
      %2388 = vmatpush2.bf16.msra.mxu0 0
      %2389 = vmatprep.subr.bf16.mxu0 0
      %2390 = vmatpush2.bf16.msra.mxu0 0
      %2391 = vmatprep.subr.bf16.mxu0 0
      %2392 = vmatpush2.bf16.msra.mxu0 0
      %2393 = vmatprep.subr.bf16.mxu0 0
      %2394 = vmatpush2.bf16.msra.mxu0 0
      %2395 = vmatprep.subr.bf16.mxu0 0
      %2396 = vmatpush2.bf16.msra.mxu0 0
      %2397 = vmatprep.subr.bf16.mxu0 0
      %2398 = vmatpush2.bf16.msra.mxu0 0
      %2399 = vmatprep.subr.bf16.mxu0 0
      %2400 = vmatpush2.bf16.msra.mxu0 0
      %2401 = vmatprep.subr.bf16.mxu0 0
      %2402 = vmatpush2.bf16.msra.mxu0 0
      %2403 = vmatprep.mubr.bf16.mxu0 0
      %2404 = vmatmul.mubr.bf16.gmra.mxu0 %v2317
      %v2405 = vpop.f32.mrf.mxu0
      %v2406 = vadd.f32 0.0, %v2405
      %v2407 = vpop.f32.mrf.mxu0
      %v2408 = vpop.f32.mrf.mxu0
      %v2409 = vadd.f32 0.0, %v2408
      %v2410 = vpop.f32.mrf.mxu0
      %2411 = vdwg.mxu0
      %v2412 = vadd.f32 %v2276, %v2363
      %v2413 = vadd.f32 %v2277, %v2365
      %v2414 = vadd.f32 %v2278, %v2406
      %v2415 = vadd.f32 %v2279, %v2367
      %v2416 = vadd.f32 %v2280, %v2369
      %v2417 = vadd.f32 %v2281, %v2409
      %s2418 = scalar_lea.vmem %s6, 56
      %v2419 = vld [vmem:[%s2418] sm:$0xf]
      %v2420 = vld [vmem:[%s2418 + $0x4] sm:$0xf]
      %v2421 = vld [vmem:[#allocation3] sm:$0x3f]
      %v2424 = vunpack.c.l.b16 %v2419
      %v2425 = vunpack.c.l.b16 %v2420
      %v2426 = vpack.c.b16 %v2425, %v2424
      %v2428 = vcombine.high %v2421, %v2421
      %v2430 = vunpack.c.l.s4 1983009808
      %v2431 = vunpack.c.0.s8 %v2430
      %v2432 = vlaneseq
      %v2433 = vshrl.u32 %v2432, 7
      %v2434 = vsub.s32 %v2431, %v2433
      %v2435 = vrot.slane %v2421, %v2434
      %v2437 = vunpack.c.l.s4 1983009808
      %v2438 = vunpack.c.0.s8 %v2437
      %v2439 = vlaneseq
      %v2440 = vshrl.u32 %v2439, 7
      %v2441 = vsub.s32 %v2438, %v2440
      %v2442 = vrot.slane %v2428, %v2441
      %v2443 = vcombine.high %v2435, %v2435
      %2444 = vrot.lane.b32.xlu0 %v2435, 68
      %v2445 = vpop.permute.xlu0 %2444
      %2446 = vrot.lane.b32.xlu0 %v2443, 68
      %v2447 = vpop.permute.xlu0 %2446
      %2448 = vrot.lane.b32.xlu0 %v2442, 68
      %v2449 = vpop.permute.xlu0 %2448
      %v2450 = vsel %vm1241, %v2445, %v2447
      %v2451 = vsel %vm1241, %v2447, %v2449
      %v2453 = vsel %vm1531, %v2426, 0
      %v2456 = vsel %vm1535, %v2450, 0
      %v2459 = vsel %vm1535, %v2451, 0
      %v2462 = vsel %vm1535, %v2449, 0
      %2464 = vmatprep.subr.bf16.mxu0 0
      %2465 = vmatpush1.bf16.msra.mxu0 0
      %2466 = vmatprep.subr.bf16.mxu0 0
      %2467 = vmatpush1.bf16.msra.mxu0 0
      %2468 = vmatprep.subr.bf16.mxu0 0
      %2469 = vmatpush1.bf16.msra.mxu0 0
      %2470 = vmatprep.subr.bf16.mxu0 0
      %2471 = vmatpush1.bf16.msra.mxu0 0
      %2472 = vmatprep.subr.bf16.mxu0 0
      %2473 = vmatpush1.bf16.msra.mxu0 0
      %2474 = vmatprep.subr.bf16.mxu0 0
      %2475 = vmatpush1.bf16.msra.mxu0 0
      %2476 = vmatprep.subr.bf16.mxu0 0
      %2477 = vmatpush1.bf16.msra.mxu0 0
      %2478 = vmatprep.subr.bf16.mxu0 %v2459
      %2479 = vmatpush1.bf16.msra.mxu0 %v2456
      %2480 = vmatprep.subr.bf16.mxu0 0
      %2481 = vmatpush2.bf16.msra.mxu0 0
      %2482 = vmatprep.subr.bf16.mxu0 0
      %2483 = vmatpush2.bf16.msra.mxu0 0
      %2484 = vmatprep.subr.bf16.mxu0 0
      %2485 = vmatpush2.bf16.msra.mxu0 0
      %2486 = vmatprep.subr.bf16.mxu0 0
      %2487 = vmatpush2.bf16.msra.mxu0 0
      %2488 = vmatprep.subr.bf16.mxu0 0
      %2489 = vmatpush2.bf16.msra.mxu0 0
      %2490 = vmatprep.subr.bf16.mxu0 0
      %2491 = vmatpush2.bf16.msra.mxu0 0
      %2492 = vmatprep.subr.bf16.mxu0 0
      %2493 = vmatpush2.bf16.msra.mxu0 0
      %2494 = vmatprep.subr.bf16.mxu0 0
      %2495 = vmatpush2.bf16.msra.mxu0 0
      %2496 = vmatprep.mubr.bf16.mxu0 0
      %2497 = vmatmul.mubr.bf16.gmra.mxu0 %v2453
      %v2498 = vpop.f32.mrf.mxu0
      %v2499 = vadd.f32 0.0, %v2498
      %v2500 = vpop.f32.mrf.mxu0
      %v2501 = vadd.f32 0.0, %v2500
      %v2502 = vpop.f32.mrf.mxu0
      %v2503 = vadd.f32 0.0, %v2502
      %v2504 = vpop.f32.mrf.mxu0
      %v2505 = vadd.f32 0.0, %v2504
      %2506 = vdwg.mxu0
      %2507 = vmatprep.subr.bf16.mxu0 0
      %2508 = vmatpush1.bf16.msra.mxu0 0
      %2509 = vmatprep.subr.bf16.mxu0 0
      %2510 = vmatpush1.bf16.msra.mxu0 0
      %2511 = vmatprep.subr.bf16.mxu0 0
      %2512 = vmatpush1.bf16.msra.mxu0 0
      %2513 = vmatprep.subr.bf16.mxu0 0
      %2514 = vmatpush1.bf16.msra.mxu0 0
      %2515 = vmatprep.subr.bf16.mxu0 0
      %2516 = vmatpush1.bf16.msra.mxu0 0
      %2517 = vmatprep.subr.bf16.mxu0 0
      %2518 = vmatpush1.bf16.msra.mxu0 0
      %2519 = vmatprep.subr.bf16.mxu0 0
      %2520 = vmatpush1.bf16.msra.mxu0 0
      %2521 = vmatprep.subr.bf16.mxu0 0
      %2522 = vmatpush1.bf16.msra.mxu0 %v2462
      %2523 = vmatprep.subr.bf16.mxu0 0
      %2524 = vmatpush2.bf16.msra.mxu0 0
      %2525 = vmatprep.subr.bf16.mxu0 0
      %2526 = vmatpush2.bf16.msra.mxu0 0
      %2527 = vmatprep.subr.bf16.mxu0 0
      %2528 = vmatpush2.bf16.msra.mxu0 0
      %2529 = vmatprep.subr.bf16.mxu0 0
      %2530 = vmatpush2.bf16.msra.mxu0 0
      %2531 = vmatprep.subr.bf16.mxu0 0
      %2532 = vmatpush2.bf16.msra.mxu0 0
      %2533 = vmatprep.subr.bf16.mxu0 0
      %2534 = vmatpush2.bf16.msra.mxu0 0
      %2535 = vmatprep.subr.bf16.mxu0 0
      %2536 = vmatpush2.bf16.msra.mxu0 0
      %2537 = vmatprep.subr.bf16.mxu0 0
      %2538 = vmatpush2.bf16.msra.mxu0 0
      %2539 = vmatprep.mubr.bf16.mxu0 0
      %2540 = vmatmul.mubr.bf16.gmra.mxu0 %v2453
      %v2541 = vpop.f32.mrf.mxu0
      %v2542 = vadd.f32 0.0, %v2541
      %v2543 = vpop.f32.mrf.mxu0
      %v2544 = vpop.f32.mrf.mxu0
      %v2545 = vadd.f32 0.0, %v2544
      %v2546 = vpop.f32.mrf.mxu0
      %2547 = vdwg.mxu0
      %v2548 = vadd.f32 %v2412, %v2499
      %v2549 = vadd.f32 %v2413, %v2501
      %v2550 = vadd.f32 %v2414, %v2542
      %v2551 = vadd.f32 %v2415, %v2503
      %v2552 = vadd.f32 %v2416, %v2505
      %v2553 = vadd.f32 %v2417, %v2545
      %s2554 = scalar_lea.vmem %s6, 64
      %v2555 = vld [vmem:[%s2554] sm:$0xf]
      %v2556 = vld [vmem:[%s2554 + $0x4] sm:$0xf]
      %v2557 = vld [vmem:[#allocation3] sm:$0x3f]
      %v2560 = vunpack.c.l.b16 %v2555
      %v2561 = vunpack.c.l.b16 %v2556
      %v2562 = vpack.c.b16 %v2561, %v2560
      %v2564 = vcombine.high %v2557, %v2557
      %v2566 = vunpack.c.l.s4 1983009808
      %v2567 = vunpack.c.0.s8 %v2566
      %v2568 = vlaneseq
      %v2569 = vshrl.u32 %v2568, 7
      %v2570 = vsub.s32 %v2567, %v2569
      %v2571 = vrot.slane %v2557, %v2570
      %v2573 = vunpack.c.l.s4 1983009808
      %v2574 = vunpack.c.0.s8 %v2573
      %v2575 = vlaneseq
      %v2576 = vshrl.u32 %v2575, 7
      %v2577 = vsub.s32 %v2574, %v2576
      %v2578 = vrot.slane %v2564, %v2577
      %v2579 = vcombine.high %v2571, %v2571
      %2580 = vrot.lane.b32.xlu0 %v2571, 67
      %v2581 = vpop.permute.xlu0 %2580
      %2582 = vrot.lane.b32.xlu0 %v2579, 67
      %v2583 = vpop.permute.xlu0 %2582
      %2584 = vrot.lane.b32.xlu0 %v2578, 67
      %v2585 = vpop.permute.xlu0 %2584
      %v2586 = vsel %vm1348, %v2581, %v2583
      %v2587 = vsel %vm1348, %v2583, %v2585
      %v2589 = vsel %vm1531, %v2562, 0
      %v2592 = vsel %vm1535, %v2586, 0
      %v2595 = vsel %vm1535, %v2587, 0
      %v2598 = vsel %vm1535, %v2585, 0
      %2600 = vmatprep.subr.bf16.mxu0 0
      %2601 = vmatpush1.bf16.msra.mxu0 0
      %2602 = vmatprep.subr.bf16.mxu0 0
      %2603 = vmatpush1.bf16.msra.mxu0 0
      %2604 = vmatprep.subr.bf16.mxu0 0
      %2605 = vmatpush1.bf16.msra.mxu0 0
      %2606 = vmatprep.subr.bf16.mxu0 0
      %2607 = vmatpush1.bf16.msra.mxu0 0
      %2608 = vmatprep.subr.bf16.mxu0 0
      %2609 = vmatpush1.bf16.msra.mxu0 0
      %2610 = vmatprep.subr.bf16.mxu0 0
      %2611 = vmatpush1.bf16.msra.mxu0 0
      %2612 = vmatprep.subr.bf16.mxu0 0
      %2613 = vmatpush1.bf16.msra.mxu0 0
      %2614 = vmatprep.subr.bf16.mxu0 %v2595
      %2615 = vmatpush1.bf16.msra.mxu0 %v2592
      %2616 = vmatprep.subr.bf16.mxu0 0
      %2617 = vmatpush2.bf16.msra.mxu0 0
      %2618 = vmatprep.subr.bf16.mxu0 0
      %2619 = vmatpush2.bf16.msra.mxu0 0
      %2620 = vmatprep.subr.bf16.mxu0 0
      %2621 = vmatpush2.bf16.msra.mxu0 0
      %2622 = vmatprep.subr.bf16.mxu0 0
      %2623 = vmatpush2.bf16.msra.mxu0 0
      %2624 = vmatprep.subr.bf16.mxu0 0
      %2625 = vmatpush2.bf16.msra.mxu0 0
      %2626 = vmatprep.subr.bf16.mxu0 0
      %2627 = vmatpush2.bf16.msra.mxu0 0
      %2628 = vmatprep.subr.bf16.mxu0 0
      %2629 = vmatpush2.bf16.msra.mxu0 0
      %2630 = vmatprep.subr.bf16.mxu0 0
      %2631 = vmatpush2.bf16.msra.mxu0 0
      %2632 = vmatprep.mubr.bf16.mxu0 0
      %2633 = vmatmul.mubr.bf16.gmra.mxu0 %v2589
      %v2634 = vpop.f32.mrf.mxu0
      %v2635 = vadd.f32 0.0, %v2634
      %v2636 = vpop.f32.mrf.mxu0
      %v2637 = vadd.f32 0.0, %v2636
      %v2638 = vpop.f32.mrf.mxu0
      %v2639 = vadd.f32 0.0, %v2638
      %v2640 = vpop.f32.mrf.mxu0
      %v2641 = vadd.f32 0.0, %v2640
      %2642 = vdwg.mxu0
      %2643 = vmatprep.subr.bf16.mxu0 0
      %2644 = vmatpush1.bf16.msra.mxu0 0
      %2645 = vmatprep.subr.bf16.mxu0 0
      %2646 = vmatpush1.bf16.msra.mxu0 0
      %2647 = vmatprep.subr.bf16.mxu0 0
      %2648 = vmatpush1.bf16.msra.mxu0 0
      %2649 = vmatprep.subr.bf16.mxu0 0
      %2650 = vmatpush1.bf16.msra.mxu0 0
      %2651 = vmatprep.subr.bf16.mxu0 0
      %2652 = vmatpush1.bf16.msra.mxu0 0
      %2653 = vmatprep.subr.bf16.mxu0 0
      %2654 = vmatpush1.bf16.msra.mxu0 0
      %2655 = vmatprep.subr.bf16.mxu0 0
      %2656 = vmatpush1.bf16.msra.mxu0 0
      %2657 = vmatprep.subr.bf16.mxu0 0
      %2658 = vmatpush1.bf16.msra.mxu0 %v2598
      %2659 = vmatprep.subr.bf16.mxu0 0
      %2660 = vmatpush2.bf16.msra.mxu0 0
      %2661 = vmatprep.subr.bf16.mxu0 0
      %2662 = vmatpush2.bf16.msra.mxu0 0
      %2663 = vmatprep.subr.bf16.mxu0 0
      %2664 = vmatpush2.bf16.msra.mxu0 0
      %2665 = vmatprep.subr.bf16.mxu0 0
      %2666 = vmatpush2.bf16.msra.mxu0 0
      %2667 = vmatprep.subr.bf16.mxu0 0
      %2668 = vmatpush2.bf16.msra.mxu0 0
      %2669 = vmatprep.subr.bf16.mxu0 0
      %2670 = vmatpush2.bf16.msra.mxu0 0
      %2671 = vmatprep.subr.bf16.mxu0 0
      %2672 = vmatpush2.bf16.msra.mxu0 0
      %2673 = vmatprep.subr.bf16.mxu0 0
      %2674 = vmatpush2.bf16.msra.mxu0 0
      %2675 = vmatprep.mubr.bf16.mxu0 0
      %2676 = vmatmul.mubr.bf16.gmra.mxu0 %v2589
      %v2677 = vpop.f32.mrf.mxu0
      %v2678 = vadd.f32 0.0, %v2677
      %v2679 = vpop.f32.mrf.mxu0
      %v2680 = vpop.f32.mrf.mxu0
      %v2681 = vadd.f32 0.0, %v2680
      %v2682 = vpop.f32.mrf.mxu0
      %2683 = vdwg.mxu0
      %v2684 = vadd.f32 %v2548, %v2635
      %v2685 = vadd.f32 %v2549, %v2637
      %v2686 = vadd.f32 %v2550, %v2678
      %v2687 = vadd.f32 %v2551, %v2639
      %v2688 = vadd.f32 %v2552, %v2641
      %v2689 = vadd.f32 %v2553, %v2681
      %v2690 = vld [vmem:[%s7] sm:$0xff]
      %v2691 = vld [vmem:[%s7 + $0x8] sm:$0xff]
      %2693 = vset.pattern.permute.xlu0 0
      %2694 = vperm.xlu0 %2693, %v2690
      %v2695 = vpop.permute.xlu0 %2694
      %2698 = vset.pattern.permute.xlu0 0
      %2699 = vperm.xlu0 %2698, %v2691
      %v2700 = vpop.permute.xlu0 %2699
      %v2702 = vadd.f32 %v2684, %v2695
      %v2703 = vadd.f32 %v2685, %v2695
      %v2704 = vadd.f32 %v2686, %v2695
      %v2705 = vadd.f32 %v2687, %v2700
      %v2706 = vadd.f32 %v2688, %v2700
      %v2707 = vadd.f32 %v2689, %v2700
      %2708 = vst [vmem:[%s305] sm:$0xff] %v2702
      %2709 = vst [vmem:[%s305 + $0x8] sm:$0xff] %v2703
      %vm2710 = vcmask 523264
      %2711 = vst.msk [vmem:[%s305 + $0x10] sm:$0xff] %vm2710, %v2704
      %2712 = vst [vmem:[%s305 + $0x18] sm:$0xff] %v2705
      %2713 = vst [vmem:[%s305 + $0x20] sm:$0xff] %v2706
      %2714 = vst.msk [vmem:[%s305 + $0x28] sm:$0xff] %vm2710, %v2707
      %p2715 = scmp.lt.s32.totalorder %s19, 1
      %s2716 = scalar_select %p2715, %s19, 1
      %s2717 = smul.addr %s2716, 6
      %s2718 = smul.addr %s2717, 8
      %s2719 = scalar_lea.vmem %s8, %s2718
      // Predicated region
      $region53: #{up_block_forward.1} parent=51 // pred_check
        %p2720 = pneg %p210
      $region54: #{up_block_forward.1} parent=51 // pred_check_branch
        %2722 = sbr.rel (%p2720) target = $region56
      $region55: #{up_block_forward.1} parent=51 // pred_region
        _
      $region56: #{up_block_forward.1} parent=51 // pred_fallthru
        _
    $region52: #{up_block_forward.1} parent=5 // pred_fallthru
      _
    %p2723 = scmp.le.s32.totalorder 2, %s14
    // Predicated region
    $region57: #{up_block_forward.1} parent=5 // pred_check
      %p2724 = pneg %p2723
    $region58: #{up_block_forward.1} parent=5 // pred_check_branch
      %2726 = sbr.rel (%p2724) target = $region60
    $region59: #{up_block_forward.1} parent=5 // pred_region
      %s2727 = ssub.s32 %s14, 2
      // Predicated region
      $region61: #{up_block_forward.1} parent=59 // pred_check
        %p2728 = pneg %p216
      $region62: #{up_block_forward.1} parent=59 // pred_check_branch
        %2730 = sbr.rel (%p2728) target = $region64
      $region63: #{up_block_forward.1} parent=59 // pred_region
        %p2731 = scmp.lt.s32.totalorder %s20, 1
        %s2732 = scalar_select %p2731, %s20, 1
        %s2733 = smul.addr %s2732, 6
        %s2734 = smul.addr %s2733, 8
        %s2735 = scalar_lea.vmem %s8, %s2734
      $region64: #{up_block_forward.1} parent=59 // pred_fallthru
        _
    $region60: #{up_block_forward.1} parent=5 // pred_fallthru
      _
  $region6: #{up_block_forward.1} parent=0 // loop_footer
    %s18 = sadd.s32 1, %s14
  $region7: #{up_block_forward.1} parent=0 // loop_footer_branch
    %13 = sbr.rel target = $region3
  $region8: #{up_block_forward.1} parent=0 // loop_exit
    _

</llo_original>
